<compile_context>
chip_gen: v6e
topology: v6e:2x2x1
jax: 0.10.0
libtpu: 0.0.40
codegen_flags: <defaults>
</compile_context>

<pallas_src>
import jax
import jax.numpy as jnp
from jax.experimental import pallas as pl
from jax.experimental.pallas import tpu as pltpu

BERT_DIM = 768  # hardcoded by BertPooler: nn.Linear(768, 768)


def pooler_kernel(x_ref, w_ref, b_ref, o_ref):
    # bf16 operands -> MXU with f32 accumulation.
    acc = jnp.dot(x_ref[...], w_ref[...], preferred_element_type=jnp.float32)
    # Bias add + tanh in f32 (works on v5e's f32-only VPU/EUP; tanh goes to EUP).
    o_ref[...] = jnp.tanh(acc + b_ref[...]).astype(o_ref.dtype)


def bert_pooler_forward(hidden_states, wp, bp, *, tb=None):
    """hidden_states: (B, S, H) f32; wp: (H, H) stored [in, out]; bp: (1, H)."""
    B, S, H = hidden_states.shape
    assert wp.shape == (H, H) and bp.shape[-1] == H

    # First-token slice in the wrapper: only the (B, H) slab enters the kernel.
    x0 = hidden_states[:, 0, :]

    # Batch tile: multiple of 8 sublanes (min 8), capped so VMEM stays small.
    if tb is None:
        tb = min(256, 8 * pl.cdiv(B, 8))
    b_pad = pl.cdiv(B, tb) * tb
    if b_pad != B:
        x0 = jnp.pad(x0, ((0, b_pad - B), (0, 0)))

    # bf16 storage for MXU operands; accumulate in f32 inside the kernel.
    x0 = x0.astype(jnp.bfloat16)
    w_bf16 = wp.astype(jnp.bfloat16)
    b_f32 = bp.reshape(1, H).astype(jnp.float32)

    out = pl.pallas_call(
        pooler_kernel,
        out_shape=jax.ShapeDtypeStruct((b_pad, H), jnp.float32),
        grid_spec=pltpu.PrefetchScalarGridSpec(
            num_scalar_prefetch=0,
            grid=(b_pad // tb,),
            in_specs=[
                pl.BlockSpec((tb, H), lambda i: (i, 0)),  # activations: per batch tile
                pl.BlockSpec((H, H), lambda i: (0, 0)),   # weight: resident in VMEM
                pl.BlockSpec((1, H), lambda i: (0, 0)),   # bias: resident in VMEM
            ],
            out_specs=pl.BlockSpec((tb, H), lambda i: (i, 0)),
        ),
        compiler_params=pltpu.CompilerParams(
            dimension_semantics=("parallel",),      # batch tiles independent -> megacore
            vmem_limit_bytes=32 * 1024 * 1024,       # actual footprint is a few MiB
        ),
    )(x0, w_bf16, b_f32)
    return out[:B]


def reference_forward(hidden_states, wp, bp):
    first_tok = hidden_states[:, 0, :]
    return jnp.tanh(first_tok @ wp + bp.reshape(1, -1))


if __name__ == "__main__":
    B, S, H = 2, 8, BERT_DIM  # H fixed at 768 by the module's Linear(768, 768)

    key = jax.random.PRNGKey(0)
    k_hs, k_wp, k_bp = jax.random.split(key, 3)

    hidden_states = jax.random.normal(k_hs, (B, S, H), dtype=jnp.float32)
    # Linear(768, 768) parameters, stored [in_features, out_features] so y = x @ W + b.
    wp = jax.random.normal(k_wp, (H, H), dtype=jnp.float32) * 0.02
    bp = jax.random.normal(k_bp, (1, H), dtype=jnp.float32) * 0.02

    pooled = jax.block_until_ready(bert_pooler_forward(hidden_states, wp, bp))
    ref = reference_forward(hidden_states, wp, bp)

    assert pooled.shape == (B, H), pooled.shape
    # bf16 MXU operands with f32 accumulate: tolerance loosened vs pure f32.
    assert jnp.allclose(pooled, ref, atol=2e-2, rtol=2e-2), float(
        jnp.max(jnp.abs(pooled - ref))
    )

    print("KERNEL_OK")
</pallas_src>

<mosaic_0001>
module attributes {stable_mosaic.version = 11 : i64} {
  func.func @pooler_kernel(%arg0: i32, %arg1: memref<8x768xbf16, #tpu.memory_space<vmem>>, %arg2: memref<768x768xbf16, #tpu.memory_space<vmem>>, %arg3: memref<1x768xf32, #tpu.memory_space<vmem>>, %arg4: memref<8x768xf32, #tpu.memory_space<vmem>>) attributes {dimension_semantics = [#tpu.dimension_semantics<parallel>], iteration_bounds = array<i64: 1>, scalar_prefetch = 0 : i64, scratch_operands = 0 : i64, tpu.core_type = #tpu.core_type<tc>, window_params = [{transform_indices = @transform_0, window_bounds = array<i64: 8, 768>}, {pipeline_mode = #tpu.pipeline_mode<synchronous>, transform_indices = @transform_1, window_bounds = array<i64: 768, 768>}, {pipeline_mode = #tpu.pipeline_mode<synchronous>, transform_indices = @transform_2, window_bounds = array<i64: 1, 768>}, {transform_indices = @transform_3, window_bounds = array<i64: 8, 768>}]} {
    %c0 = arith.constant 0 : index
    %c0_0 = arith.constant 0 : index
    %0 = vector.load %arg1[%c0, %c0_0] : memref<8x768xbf16, #tpu.memory_space<vmem>>, vector<8x768xbf16>
    %c0_1 = arith.constant 0 : index
    %c0_2 = arith.constant 0 : index
    %1 = vector.load %arg2[%c0_1, %c0_2] : memref<768x768xbf16, #tpu.memory_space<vmem>>, vector<768x768xbf16>
    %cst = arith.constant dense<0.000000e+00> : vector<8x768xf32>
    %2 = tpu.matmul %0, %1, %cst {dimension_numbers = #tpu.dot_dimension_numbers<[1], [0], [0], [1], [0, 0, 1, 1], [], []>} : vector<8x768xbf16>, vector<768x768xbf16>, vector<8x768xf32> -> vector<8x768xf32>
    %c0_3 = arith.constant 0 : index
    %c0_4 = arith.constant 0 : index
    %3 = vector.load %arg3[%c0_3, %c0_4] : memref<1x768xf32, #tpu.memory_space<vmem>>, vector<1x768xf32>
    %4 = vector.broadcast %3 : vector<1x768xf32> to vector<8x768xf32>
    %5 = arith.addf %2, %4 : vector<8x768xf32>
    %6 = math.tanh %5 : vector<8x768xf32>
    %c0_5 = arith.constant 0 : index
    %c0_6 = arith.constant 0 : index
    %7 = vector.load %arg4[%c0_5, %c0_6] : memref<8x768xf32, #tpu.memory_space<vmem>>, vector<8x768xf32>
    tpu.vector_store %arg4[%c0_5, %c0_6], %6 {strides = array<i32>} : memref<8x768xf32, #tpu.memory_space<vmem>>, vector<8x768xf32>,
    return
  }
  func.func @transform_0(%arg0: i32) -> (i32, i32) {
    %c0_i32 = arith.constant 0 : i32
    %c0_i32_0 = arith.constant 0 : i32
    return %arg0, %c0_i32 : i32, i32
  }
  func.func @transform_1(%arg0: i32) -> (i32, i32) {
    %c0_i32 = arith.constant 0 : i32
    %c0_i32_0 = arith.constant 0 : i32
    %c0_i32_1 = arith.constant 0 : i32
    return %c0_i32, %c0_i32_0 : i32, i32
  }
  func.func @transform_2(%arg0: i32) -> (i32, i32) {
    %c0_i32 = arith.constant 0 : i32
    %c0_i32_0 = arith.constant 0 : i32
    %c0_i32_1 = arith.constant 0 : i32
    return %c0_i32, %c0_i32_0 : i32, i32
  }
  func.func @transform_3(%arg0: i32) -> (i32, i32) {
    %c0_i32 = arith.constant 0 : i32
    %c0_i32_0 = arith.constant 0 : i32
    return %arg0, %c0_i32 : i32, i32
  }
}

</mosaic_0001>

<llo_original>
// kernel: tpu_custom_call.1
$region0: #{tpu_custom_call.1}
  #allocation0 [shape = 'u32[]', space=smem, size = 0x4, offset = 0x4, fixed_abs, tag = 'smem constant byte address 0x4 - core index']
  #allocation1 [shape = 'u32[144,128]{1,0:T(1,128)}', space=vmem, size = 0x12000, scoped, tag = 'internal scratch']
  %s0 = inlined_call_operand.hbm [shape: bf16[8,768], index: 0, kind: input, shape index: {}]
  %s1 = inlined_call_operand.hbm [shape: bf16[768,768], index: 1, kind: input, shape index: {}]
  %s2 = inlined_call_operand.hbm [shape: f32[1,768], index: 2, kind: input, shape index: {}]
  %s3 = inlined_call_operand.hbm [shape: f32[8,768], index: 3, kind: output, shape index: {}]
  %s4 = sld [smem:[#allocation0]]
  $region34: #{tpu_custom_call.1} parent=0
    _
  %s6 = ssub.s32 1, %s4
  %s7 = scalar_select 0, %s6, %s4
  $region1: #{tpu_custom_call.1} parent=0
    #allocation2 [shape = 'u8[12288]{0}', space=vmem, size = 0x3000, scoped, tag = 'input window, operand 0, single buffered']
    #allocation3 [shape = 's32[1]{0}', space=sflag, size = 0x4, scoped, tag = 'scoped memory for tpu_custom_call.1']
    #allocation4 [shape = 's32[1]{0}', space=sflag, size = 0x4, scoped, tag = 'scoped memory for tpu_custom_call.1']
    #allocation5 [shape = 'u8[1179648]{0}', space=vmem, size = 0x120000, scoped, tag = 'input window, operand 1, single buffered']
    #allocation6 [shape = 's32[1]{0}', space=sflag, size = 0x4, scoped, tag = 'scoped memory for tpu_custom_call.1']
    #allocation7 [shape = 'u8[3072]{0}', space=vmem, size = 0xc00, scoped, tag = 'input window, operand 2, single buffered']
    #allocation8 [shape = 'u8[24576]{0}', space=vmem, size = 0x6000, scoped, tag = 'output window, operand 0, single buffered']
    %8 = vsyncpa [#allocation3], 0
    %9 = vsyncpa [#allocation6], 0
    %10 = vsyncpa [#allocation4], 0
    // Predicated region
    $region2: #{tpu_custom_call.1} parent=1 // pred_check
      _
    $region3: #{tpu_custom_call.1} parent=1 // pred_check_branch
      %12 = sbr.rel (0) target = $region5
    $region4: #{tpu_custom_call.1} parent=1 // pred_region
      %s14 = ssub.s32 384, 384
      %15 = vsyncadd [#allocation3], %s14
      %s17 = sshll.u32 [#allocation2], 4
      %s18 = int_to_ptr.vmem [resolvable:$true] %s17
      %20 = dma.hbm_to_vmem [thread:$0]  %s0, 384, %s18, [#allocation3]
    $region5: #{tpu_custom_call.1} parent=1 // pred_fallthru
      _
    // Predicated region
    $region6: #{tpu_custom_call.1} parent=1 // pred_check
      _
    $region7: #{tpu_custom_call.1} parent=1 // pred_check_branch
      %22 = sbr.rel (0) target = $region9
    $region8: #{tpu_custom_call.1} parent=1 // pred_region
      %s24 = ssub.s32 36864, 36864
      %25 = vsyncadd [#allocation6], %s24
      %s26 = sshll.u32 [#allocation5], 4
      %s27 = int_to_ptr.vmem [resolvable:$true] %s26
      %32 = dma.hbm_to_vmem [thread:$0]  %s1, 36864, %s27, [#allocation6], 384, 384, 24
    $region9: #{tpu_custom_call.1} parent=1 // pred_fallthru
      _
    // Predicated region
    $region10: #{tpu_custom_call.1} parent=1 // pred_check
      _
    $region11: #{tpu_custom_call.1} parent=1 // pred_check_branch
      %34 = sbr.rel (0) target = $region13
    $region12: #{tpu_custom_call.1} parent=1 // pred_region
      %s36 = ssub.s32 96, 96
      %37 = vsyncadd [#allocation6], %s36
      %s39 = sshll.u32 [#allocation7], 4
      %s40 = int_to_ptr.vmem [resolvable:$true] %s39
      %42 = dma.hbm_to_vmem [thread:$0]  %s2, 96, %s40, [#allocation6]
    $region13: #{tpu_custom_call.1} parent=1 // pred_fallthru
      _
    // Predicated region
    $region14: #{tpu_custom_call.1} parent=1 // pred_check
      _
    $region15: #{tpu_custom_call.1} parent=1 // pred_check_branch
      %44 = sbr.rel (0) target = $region17
    $region16: #{tpu_custom_call.1} parent=1 // pred_region
      %45 = dma.done [#allocation3], 384
    $region17: #{tpu_custom_call.1} parent=1 // pred_fallthru
      _
    // Predicated region
    $region18: #{tpu_custom_call.1} parent=1 // pred_check
      _
    $region19: #{tpu_custom_call.1} parent=1 // pred_check_branch
      %47 = sbr.rel (0) target = $region21
    $region20: #{tpu_custom_call.1} parent=1 // pred_region
      %48 = dma.done [#allocation6], 36864
    $region21: #{tpu_custom_call.1} parent=1 // pred_fallthru
      _
    // Predicated region
    $region22: #{tpu_custom_call.1} parent=1 // pred_check
      _
    $region23: #{tpu_custom_call.1} parent=1 // pred_check_branch
      %50 = sbr.rel (0) target = $region25
    $region24: #{tpu_custom_call.1} parent=1 // pred_region
      %51 = dma.done [#allocation6], 96
    $region25: #{tpu_custom_call.1} parent=1 // pred_fallthru
      _
    %v52 = vld [vmem:[#allocation2] sm:$0xff]
    %v53 = vld [vmem:[#allocation2 + $0x8] sm:$0xff]
    %v54 = vld [vmem:[#allocation2 + $0x10] sm:$0xff]
    %v55 = vld [vmem:[#allocation5] sm:$0xff]
    %v56 = vld [vmem:[#allocation5 + $0x8] sm:$0xff]
    %v57 = vld [vmem:[#allocation5 + $0x10] sm:$0xff]
    %v58 = vld [vmem:[#allocation5 + $0x18] sm:$0xff]
    %v59 = vld [vmem:[#allocation5 + $0x20] sm:$0xff]
    %v60 = vld [vmem:[#allocation5 + $0x28] sm:$0xff]
    %v61 = vld [vmem:[#allocation5 + $0x30] sm:$0xff]
    %v62 = vld [vmem:[#allocation5 + $0x38] sm:$0xff]
    %v63 = vld [vmem:[#allocation5 + $0x40] sm:$0xff]
    %v64 = vld [vmem:[#allocation5 + $0x48] sm:$0xff]
    %v65 = vld [vmem:[#allocation5 + $0x50] sm:$0xff]
    %v66 = vld [vmem:[#allocation5 + $0x58] sm:$0xff]
    %v67 = vld [vmem:[#allocation5 + $0x60] sm:$0xff]
    %v68 = vld [vmem:[#allocation5 + $0x68] sm:$0xff]
    %v69 = vld [vmem:[#allocation5 + $0x70] sm:$0xff]
    %v70 = vld [vmem:[#allocation5 + $0x78] sm:$0xff]
    %v71 = vld [vmem:[#allocation5 + $0x80] sm:$0xff]
    %v72 = vld [vmem:[#allocation5 + $0x88] sm:$0xff]
    %v73 = vld [vmem:[#allocation5 + $0x90] sm:$0xff]
    %v74 = vld [vmem:[#allocation5 + $0x98] sm:$0xff]
    %v75 = vld [vmem:[#allocation5 + $0xa0] sm:$0xff]
    %v76 = vld [vmem:[#allocation5 + $0xa8] sm:$0xff]
    %v77 = vld [vmem:[#allocation5 + $0xb0] sm:$0xff]
    %v78 = vld [vmem:[#allocation5 + $0xb8] sm:$0xff]
    %v79 = vld [vmem:[#allocation5 + $0xc0] sm:$0xff]
    %v80 = vld [vmem:[#allocation5 + $0xc8] sm:$0xff]
    %v81 = vld [vmem:[#allocation5 + $0xd0] sm:$0xff]
    %v82 = vld [vmem:[#allocation5 + $0xd8] sm:$0xff]
    %v83 = vld [vmem:[#allocation5 + $0xe0] sm:$0xff]
    %v84 = vld [vmem:[#allocation5 + $0xe8] sm:$0xff]
    %v85 = vld [vmem:[#allocation5 + $0xf0] sm:$0xff]
    %v86 = vld [vmem:[#allocation5 + $0xf8] sm:$0xff]
    %v87 = vld [vmem:[#allocation5 + $0x100] sm:$0xff]
    %v88 = vld [vmem:[#allocation5 + $0x108] sm:$0xff]
    %v89 = vld [vmem:[#allocation5 + $0x110] sm:$0xff]
    %v90 = vld [vmem:[#allocation5 + $0x118] sm:$0xff]
    %v91 = vld [vmem:[#allocation5 + $0x120] sm:$0xff]
    %v92 = vld [vmem:[#allocation5 + $0x128] sm:$0xff]
    %v93 = vld [vmem:[#allocation5 + $0x130] sm:$0xff]
    %v94 = vld [vmem:[#allocation5 + $0x138] sm:$0xff]
    %v95 = vld [vmem:[#allocation5 + $0x140] sm:$0xff]
    %v96 = vld [vmem:[#allocation5 + $0x148] sm:$0xff]
    %v97 = vld [vmem:[#allocation5 + $0x150] sm:$0xff]
    %v98 = vld [vmem:[#allocation5 + $0x158] sm:$0xff]
    %v99 = vld [vmem:[#allocation5 + $0x160] sm:$0xff]
    %v100 = vld [vmem:[#allocation5 + $0x168] sm:$0xff]
    %v101 = vld [vmem:[#allocation5 + $0x170] sm:$0xff]
    %v102 = vld [vmem:[#allocation5 + $0x178] sm:$0xff]
    %v103 = vld [vmem:[#allocation5 + $0x180] sm:$0xff]
    %v104 = vld [vmem:[#allocation5 + $0x188] sm:$0xff]
    %v105 = vld [vmem:[#allocation5 + $0x190] sm:$0xff]
    %v106 = vld [vmem:[#allocation5 + $0x198] sm:$0xff]
    %v107 = vld [vmem:[#allocation5 + $0x1a0] sm:$0xff]
    %v108 = vld [vmem:[#allocation5 + $0x1a8] sm:$0xff]
    %v109 = vld [vmem:[#allocation5 + $0x1b0] sm:$0xff]
    %v110 = vld [vmem:[#allocation5 + $0x1b8] sm:$0xff]
    %v111 = vld [vmem:[#allocation5 + $0x1c0] sm:$0xff]
    %v112 = vld [vmem:[#allocation5 + $0x1c8] sm:$0xff]
    %v113 = vld [vmem:[#allocation5 + $0x1d0] sm:$0xff]
    %v114 = vld [vmem:[#allocation5 + $0x1d8] sm:$0xff]
    %v115 = vld [vmem:[#allocation5 + $0x1e0] sm:$0xff]
    %v116 = vld [vmem:[#allocation5 + $0x1e8] sm:$0xff]
    %v117 = vld [vmem:[#allocation5 + $0x1f0] sm:$0xff]
    %v118 = vld [vmem:[#allocation5 + $0x1f8] sm:$0xff]
    %v119 = vld [vmem:[#allocation5 + $0x200] sm:$0xff]
    %v120 = vld [vmem:[#allocation5 + $0x208] sm:$0xff]
    %v121 = vld [vmem:[#allocation5 + $0x210] sm:$0xff]
    %v122 = vld [vmem:[#allocation5 + $0x218] sm:$0xff]
    %v123 = vld [vmem:[#allocation5 + $0x220] sm:$0xff]
    %v124 = vld [vmem:[#allocation5 + $0x228] sm:$0xff]
    %v125 = vld [vmem:[#allocation5 + $0x230] sm:$0xff]
    %v126 = vld [vmem:[#allocation5 + $0x238] sm:$0xff]
    %v127 = vld [vmem:[#allocation5 + $0x240] sm:$0xff]
    %v128 = vld [vmem:[#allocation5 + $0x248] sm:$0xff]
    %v129 = vld [vmem:[#allocation5 + $0x250] sm:$0xff]
    %v130 = vld [vmem:[#allocation5 + $0x258] sm:$0xff]
    %v131 = vld [vmem:[#allocation5 + $0x260] sm:$0xff]
    %v132 = vld [vmem:[#allocation5 + $0x268] sm:$0xff]
    %v133 = vld [vmem:[#allocation5 + $0x270] sm:$0xff]
    %v134 = vld [vmem:[#allocation5 + $0x278] sm:$0xff]
    %v135 = vld [vmem:[#allocation5 + $0x280] sm:$0xff]
    %v136 = vld [vmem:[#allocation5 + $0x288] sm:$0xff]
    %v137 = vld [vmem:[#allocation5 + $0x290] sm:$0xff]
    %v138 = vld [vmem:[#allocation5 + $0x298] sm:$0xff]
    %v139 = vld [vmem:[#allocation5 + $0x2a0] sm:$0xff]
    %v140 = vld [vmem:[#allocation5 + $0x2a8] sm:$0xff]
    %v141 = vld [vmem:[#allocation5 + $0x2b0] sm:$0xff]
    %v142 = vld [vmem:[#allocation5 + $0x2b8] sm:$0xff]
    %v143 = vld [vmem:[#allocation5 + $0x2c0] sm:$0xff]
    %v144 = vld [vmem:[#allocation5 + $0x2c8] sm:$0xff]
    %v145 = vld [vmem:[#allocation5 + $0x2d0] sm:$0xff]
    %v146 = vld [vmem:[#allocation5 + $0x2d8] sm:$0xff]
    %v147 = vld [vmem:[#allocation5 + $0x2e0] sm:$0xff]
    %v148 = vld [vmem:[#allocation5 + $0x2e8] sm:$0xff]
    %v149 = vld [vmem:[#allocation5 + $0x2f0] sm:$0xff]
    %v150 = vld [vmem:[#allocation5 + $0x2f8] sm:$0xff]
    %v151 = vld [vmem:[#allocation5 + $0x300] sm:$0xff]
    %v152 = vld [vmem:[#allocation5 + $0x308] sm:$0xff]
    %v153 = vld [vmem:[#allocation5 + $0x310] sm:$0xff]
    %v154 = vld [vmem:[#allocation5 + $0x318] sm:$0xff]
    %v155 = vld [vmem:[#allocation5 + $0x320] sm:$0xff]
    %v156 = vld [vmem:[#allocation5 + $0x328] sm:$0xff]
    %v157 = vld [vmem:[#allocation5 + $0x330] sm:$0xff]
    %v158 = vld [vmem:[#allocation5 + $0x338] sm:$0xff]
    %v159 = vld [vmem:[#allocation5 + $0x340] sm:$0xff]
    %v160 = vld [vmem:[#allocation5 + $0x348] sm:$0xff]
    %v161 = vld [vmem:[#allocation5 + $0x350] sm:$0xff]
    %v162 = vld [vmem:[#allocation5 + $0x358] sm:$0xff]
    %v163 = vld [vmem:[#allocation5 + $0x360] sm:$0xff]
    %v164 = vld [vmem:[#allocation5 + $0x368] sm:$0xff]
    %v165 = vld [vmem:[#allocation5 + $0x370] sm:$0xff]
    %v166 = vld [vmem:[#allocation5 + $0x378] sm:$0xff]
    %v167 = vld [vmem:[#allocation5 + $0x380] sm:$0xff]
    %v168 = vld [vmem:[#allocation5 + $0x388] sm:$0xff]
    %v169 = vld [vmem:[#allocation5 + $0x390] sm:$0xff]
    %v170 = vld [vmem:[#allocation5 + $0x398] sm:$0xff]
    %v171 = vld [vmem:[#allocation5 + $0x3a0] sm:$0xff]
    %v172 = vld [vmem:[#allocation5 + $0x3a8] sm:$0xff]
    %v173 = vld [vmem:[#allocation5 + $0x3b0] sm:$0xff]
    %v174 = vld [vmem:[#allocation5 + $0x3b8] sm:$0xff]
    %v175 = vld [vmem:[#allocation5 + $0x3c0] sm:$0xff]
    %v176 = vld [vmem:[#allocation5 + $0x3c8] sm:$0xff]
    %v177 = vld [vmem:[#allocation5 + $0x3d0] sm:$0xff]
    %v178 = vld [vmem:[#allocation5 + $0x3d8] sm:$0xff]
    %v179 = vld [vmem:[#allocation5 + $0x3e0] sm:$0xff]
    %v180 = vld [vmem:[#allocation5 + $0x3e8] sm:$0xff]
    %v181 = vld [vmem:[#allocation5 + $0x3f0] sm:$0xff]
    %v182 = vld [vmem:[#allocation5 + $0x3f8] sm:$0xff]
    %v183 = vld [vmem:[#allocation5 + $0x400] sm:$0xff]
    %v184 = vld [vmem:[#allocation5 + $0x408] sm:$0xff]
    %v185 = vld [vmem:[#allocation5 + $0x410] sm:$0xff]
    %v186 = vld [vmem:[#allocation5 + $0x418] sm:$0xff]
    %v187 = vld [vmem:[#allocation5 + $0x420] sm:$0xff]
    %v188 = vld [vmem:[#allocation5 + $0x428] sm:$0xff]
    %v189 = vld [vmem:[#allocation5 + $0x430] sm:$0xff]
    %v190 = vld [vmem:[#allocation5 + $0x438] sm:$0xff]
    %v191 = vld [vmem:[#allocation5 + $0x440] sm:$0xff]
    %v192 = vld [vmem:[#allocation5 + $0x448] sm:$0xff]
    %v193 = vld [vmem:[#allocation5 + $0x450] sm:$0xff]
    %v194 = vld [vmem:[#allocation5 + $0x458] sm:$0xff]
    %v195 = vld [vmem:[#allocation5 + $0x460] sm:$0xff]
    %v196 = vld [vmem:[#allocation5 + $0x468] sm:$0xff]
    %v197 = vld [vmem:[#allocation5 + $0x470] sm:$0xff]
    %v198 = vld [vmem:[#allocation5 + $0x478] sm:$0xff]
    %v199 = vld [vmem:[#allocation5 + $0x480] sm:$0xff]
    %v200 = vld [vmem:[#allocation5 + $0x488] sm:$0xff]
    %v201 = vld [vmem:[#allocation5 + $0x490] sm:$0xff]
    %v202 = vld [vmem:[#allocation5 + $0x498] sm:$0xff]
    %v203 = vld [vmem:[#allocation5 + $0x4a0] sm:$0xff]
    %v204 = vld [vmem:[#allocation5 + $0x4a8] sm:$0xff]
    %v205 = vld [vmem:[#allocation5 + $0x4b0] sm:$0xff]
    %v206 = vld [vmem:[#allocation5 + $0x4b8] sm:$0xff]
    %v207 = vld [vmem:[#allocation5 + $0x4c0] sm:$0xff]
    %v208 = vld [vmem:[#allocation5 + $0x4c8] sm:$0xff]
    %v209 = vld [vmem:[#allocation5 + $0x4d0] sm:$0xff]
    %v210 = vld [vmem:[#allocation5 + $0x4d8] sm:$0xff]
    %v211 = vld [vmem:[#allocation5 + $0x4e0] sm:$0xff]
    %v212 = vld [vmem:[#allocation5 + $0x4e8] sm:$0xff]
    %v213 = vld [vmem:[#allocation5 + $0x4f0] sm:$0xff]
    %v214 = vld [vmem:[#allocation5 + $0x4f8] sm:$0xff]
    %v215 = vld [vmem:[#allocation5 + $0x500] sm:$0xff]
    %v216 = vld [vmem:[#allocation5 + $0x508] sm:$0xff]
    %v217 = vld [vmem:[#allocation5 + $0x510] sm:$0xff]
    %v218 = vld [vmem:[#allocation5 + $0x518] sm:$0xff]
    %v219 = vld [vmem:[#allocation5 + $0x520] sm:$0xff]
    %v220 = vld [vmem:[#allocation5 + $0x528] sm:$0xff]
    %v221 = vld [vmem:[#allocation5 + $0x530] sm:$0xff]
    %v222 = vld [vmem:[#allocation5 + $0x538] sm:$0xff]
    %v223 = vld [vmem:[#allocation5 + $0x540] sm:$0xff]
    %v224 = vld [vmem:[#allocation5 + $0x548] sm:$0xff]
    %v225 = vld [vmem:[#allocation5 + $0x550] sm:$0xff]
    %v226 = vld [vmem:[#allocation5 + $0x558] sm:$0xff]
    %v227 = vld [vmem:[#allocation5 + $0x560] sm:$0xff]
    %v228 = vld [vmem:[#allocation5 + $0x568] sm:$0xff]
    %v229 = vld [vmem:[#allocation5 + $0x570] sm:$0xff]
    %v230 = vld [vmem:[#allocation5 + $0x578] sm:$0xff]
    %v231 = vld [vmem:[#allocation5 + $0x580] sm:$0xff]
    %v232 = vld [vmem:[#allocation5 + $0x588] sm:$0xff]
    %v233 = vld [vmem:[#allocation5 + $0x590] sm:$0xff]
    %v234 = vld [vmem:[#allocation5 + $0x598] sm:$0xff]
    %v235 = vld [vmem:[#allocation5 + $0x5a0] sm:$0xff]
    %v236 = vld [vmem:[#allocation5 + $0x5a8] sm:$0xff]
    %v237 = vld [vmem:[#allocation5 + $0x5b0] sm:$0xff]
    %v238 = vld [vmem:[#allocation5 + $0x5b8] sm:$0xff]
    %v239 = vld [vmem:[#allocation5 + $0x5c0] sm:$0xff]
    %v240 = vld [vmem:[#allocation5 + $0x5c8] sm:$0xff]
    %v241 = vld [vmem:[#allocation5 + $0x5d0] sm:$0xff]
    %v242 = vld [vmem:[#allocation5 + $0x5d8] sm:$0xff]
    %v243 = vld [vmem:[#allocation5 + $0x5e0] sm:$0xff]
    %v244 = vld [vmem:[#allocation5 + $0x5e8] sm:$0xff]
    %v245 = vld [vmem:[#allocation5 + $0x5f0] sm:$0xff]
    %v246 = vld [vmem:[#allocation5 + $0x5f8] sm:$0xff]
    %v247 = vld [vmem:[#allocation5 + $0x600] sm:$0xff]
    %v248 = vld [vmem:[#allocation5 + $0x608] sm:$0xff]
    %v249 = vld [vmem:[#allocation5 + $0x610] sm:$0xff]
    %v250 = vld [vmem:[#allocation5 + $0x618] sm:$0xff]
    %v251 = vld [vmem:[#allocation5 + $0x620] sm:$0xff]
    %v252 = vld [vmem:[#allocation5 + $0x628] sm:$0xff]
    %v253 = vld [vmem:[#allocation5 + $0x630] sm:$0xff]
    %v254 = vld [vmem:[#allocation5 + $0x638] sm:$0xff]
    %v255 = vld [vmem:[#allocation5 + $0x640] sm:$0xff]
    %v256 = vld [vmem:[#allocation5 + $0x648] sm:$0xff]
    %v257 = vld [vmem:[#allocation5 + $0x650] sm:$0xff]
    %v258 = vld [vmem:[#allocation5 + $0x658] sm:$0xff]
    %v259 = vld [vmem:[#allocation5 + $0x660] sm:$0xff]
    %v260 = vld [vmem:[#allocation5 + $0x668] sm:$0xff]
    %v261 = vld [vmem:[#allocation5 + $0x670] sm:$0xff]
    %v262 = vld [vmem:[#allocation5 + $0x678] sm:$0xff]
    %v263 = vld [vmem:[#allocation5 + $0x680] sm:$0xff]
    %v264 = vld [vmem:[#allocation5 + $0x688] sm:$0xff]
    %v265 = vld [vmem:[#allocation5 + $0x690] sm:$0xff]
    %v266 = vld [vmem:[#allocation5 + $0x698] sm:$0xff]
    %v267 = vld [vmem:[#allocation5 + $0x6a0] sm:$0xff]
    %v268 = vld [vmem:[#allocation5 + $0x6a8] sm:$0xff]
    %v269 = vld [vmem:[#allocation5 + $0x6b0] sm:$0xff]
    %v270 = vld [vmem:[#allocation5 + $0x6b8] sm:$0xff]
    %v271 = vld [vmem:[#allocation5 + $0x6c0] sm:$0xff]
    %v272 = vld [vmem:[#allocation5 + $0x6c8] sm:$0xff]
    %v273 = vld [vmem:[#allocation5 + $0x6d0] sm:$0xff]
    %v274 = vld [vmem:[#allocation5 + $0x6d8] sm:$0xff]
    %v275 = vld [vmem:[#allocation5 + $0x6e0] sm:$0xff]
    %v276 = vld [vmem:[#allocation5 + $0x6e8] sm:$0xff]
    %v277 = vld [vmem:[#allocation5 + $0x6f0] sm:$0xff]
    %v278 = vld [vmem:[#allocation5 + $0x6f8] sm:$0xff]
    %v279 = vld [vmem:[#allocation5 + $0x700] sm:$0xff]
    %v280 = vld [vmem:[#allocation5 + $0x708] sm:$0xff]
    %v281 = vld [vmem:[#allocation5 + $0x710] sm:$0xff]
    %v282 = vld [vmem:[#allocation5 + $0x718] sm:$0xff]
    %v283 = vld [vmem:[#allocation5 + $0x720] sm:$0xff]
    %v284 = vld [vmem:[#allocation5 + $0x728] sm:$0xff]
    %v285 = vld [vmem:[#allocation5 + $0x730] sm:$0xff]
    %v286 = vld [vmem:[#allocation5 + $0x738] sm:$0xff]
    %v287 = vld [vmem:[#allocation5 + $0x740] sm:$0xff]
    %v288 = vld [vmem:[#allocation5 + $0x748] sm:$0xff]
    %v289 = vld [vmem:[#allocation5 + $0x750] sm:$0xff]
    %v290 = vld [vmem:[#allocation5 + $0x758] sm:$0xff]
    %v291 = vld [vmem:[#allocation5 + $0x760] sm:$0xff]
    %v292 = vld [vmem:[#allocation5 + $0x768] sm:$0xff]
    %v293 = vld [vmem:[#allocation5 + $0x770] sm:$0xff]
    %v294 = vld [vmem:[#allocation5 + $0x778] sm:$0xff]
    %v295 = vld [vmem:[#allocation5 + $0x780] sm:$0xff]
    %v296 = vld [vmem:[#allocation5 + $0x788] sm:$0xff]
    %v297 = vld [vmem:[#allocation5 + $0x790] sm:$0xff]
    %v298 = vld [vmem:[#allocation5 + $0x798] sm:$0xff]
    %v299 = vld [vmem:[#allocation5 + $0x7a0] sm:$0xff]
    %v300 = vld [vmem:[#allocation5 + $0x7a8] sm:$0xff]
    %v301 = vld [vmem:[#allocation5 + $0x7b0] sm:$0xff]
    %v302 = vld [vmem:[#allocation5 + $0x7b8] sm:$0xff]
    %v303 = vld [vmem:[#allocation5 + $0x7c0] sm:$0xff]
    %v304 = vld [vmem:[#allocation5 + $0x7c8] sm:$0xff]
    %v305 = vld [vmem:[#allocation5 + $0x7d0] sm:$0xff]
    %v306 = vld [vmem:[#allocation5 + $0x7d8] sm:$0xff]
    %v307 = vld [vmem:[#allocation5 + $0x7e0] sm:$0xff]
    %v308 = vld [vmem:[#allocation5 + $0x7e8] sm:$0xff]
    %v309 = vld [vmem:[#allocation5 + $0x7f0] sm:$0xff]
    %v310 = vld [vmem:[#allocation5 + $0x7f8] sm:$0xff]
    %v311 = vld [vmem:[#allocation5 + $0x800] sm:$0xff]
    %v312 = vld [vmem:[#allocation5 + $0x808] sm:$0xff]
    %v313 = vld [vmem:[#allocation5 + $0x810] sm:$0xff]
    %v314 = vld [vmem:[#allocation5 + $0x818] sm:$0xff]
    %v315 = vld [vmem:[#allocation5 + $0x820] sm:$0xff]
    %v316 = vld [vmem:[#allocation5 + $0x828] sm:$0xff]
    %v317 = vld [vmem:[#allocation5 + $0x830] sm:$0xff]
    %v318 = vld [vmem:[#allocation5 + $0x838] sm:$0xff]
    %v319 = vld [vmem:[#allocation5 + $0x840] sm:$0xff]
    %v320 = vld [vmem:[#allocation5 + $0x848] sm:$0xff]
    %v321 = vld [vmem:[#allocation5 + $0x850] sm:$0xff]
    %v322 = vld [vmem:[#allocation5 + $0x858] sm:$0xff]
    %v323 = vld [vmem:[#allocation5 + $0x860] sm:$0xff]
    %v324 = vld [vmem:[#allocation5 + $0x868] sm:$0xff]
    %v325 = vld [vmem:[#allocation5 + $0x870] sm:$0xff]
    %v326 = vld [vmem:[#allocation5 + $0x878] sm:$0xff]
    %v327 = vld [vmem:[#allocation5 + $0x880] sm:$0xff]
    %v328 = vld [vmem:[#allocation5 + $0x888] sm:$0xff]
    %v329 = vld [vmem:[#allocation5 + $0x890] sm:$0xff]
    %v330 = vld [vmem:[#allocation5 + $0x898] sm:$0xff]
    %v331 = vld [vmem:[#allocation5 + $0x8a0] sm:$0xff]
    %v332 = vld [vmem:[#allocation5 + $0x8a8] sm:$0xff]
    %v333 = vld [vmem:[#allocation5 + $0x8b0] sm:$0xff]
    %v334 = vld [vmem:[#allocation5 + $0x8b8] sm:$0xff]
    %v335 = vld [vmem:[#allocation5 + $0x8c0] sm:$0xff]
    %v336 = vld [vmem:[#allocation5 + $0x8c8] sm:$0xff]
    %v337 = vld [vmem:[#allocation5 + $0x8d0] sm:$0xff]
    %v338 = vld [vmem:[#allocation5 + $0x8d8] sm:$0xff]
    %v339 = vld [vmem:[#allocation5 + $0x8e0] sm:$0xff]
    %v340 = vld [vmem:[#allocation5 + $0x8e8] sm:$0xff]
    %v341 = vld [vmem:[#allocation5 + $0x8f0] sm:$0xff]
    %v342 = vld [vmem:[#allocation5 + $0x8f8] sm:$0xff]
    %v343 = vld [vmem:[#allocation7] sm:$0x3f]
    %v345 = vlaneseq
    %v346 = vshrl.u32 %v345, 7
    %v347 = vsub.s32 0, %v346
    %v348 = vrot.slane %v343, %v347
    %v349 = vlaneseq
    %v350 = vshrl.u32 %v349, 7
    %v351 = vsub.s32 1, %v350
    %v352 = vrot.slane %v343, %v351
    %v353 = vlaneseq
    %v354 = vshrl.u32 %v353, 7
    %v355 = vsub.s32 2, %v354
    %v356 = vrot.slane %v343, %v355
    %v357 = vlaneseq
    %v358 = vshrl.u32 %v357, 7
    %v359 = vsub.s32 3, %v358
    %v360 = vrot.slane %v343, %v359
    %v361 = vlaneseq
    %v362 = vshrl.u32 %v361, 7
    %v363 = vsub.s32 4, %v362
    %v364 = vrot.slane %v343, %v363
    %v365 = vlaneseq
    %v366 = vshrl.u32 %v365, 7
    %v367 = vsub.s32 5, %v366
    %v368 = vrot.slane %v343, %v367
    %v378 = vunpack.c.l.b16 %v52
    %v379 = vunpack.c.h.b16 %v52
    %v380 = vunpack.c.l.b16 %v53
    %v381 = vunpack.c.h.b16 %v53
    %v382 = vunpack.c.l.b16 %v54
    %v383 = vunpack.c.h.b16 %v54
    %v384 = vpack.c.b16 %v378, %v378
    %v385 = vpack.c.b16 %v379, %v379
    %v386 = vpack.c.b16 %v380, %v380
    %v387 = vpack.c.b16 %v381, %v381
    %v388 = vpack.c.b16 %v382, %v382
    %v389 = vpack.c.b16 %v383, %v383
    %v684 = vunpack.c.l.b16 %v55
    %v685 = vunpack.c.h.b16 %v55
    %v686 = vunpack.c.l.b16 %v56
    %v687 = vunpack.c.h.b16 %v56
    %v688 = vunpack.c.l.b16 %v57
    %v689 = vunpack.c.h.b16 %v57
    %v690 = vunpack.c.l.b16 %v58
    %v691 = vunpack.c.h.b16 %v58
    %v692 = vunpack.c.l.b16 %v59
    %v693 = vunpack.c.h.b16 %v59
    %v694 = vunpack.c.l.b16 %v60
    %v695 = vunpack.c.h.b16 %v60
    %v696 = vunpack.c.l.b16 %v61
    %v697 = vunpack.c.h.b16 %v61
    %v698 = vunpack.c.l.b16 %v62
    %v699 = vunpack.c.h.b16 %v62
    %v700 = vunpack.c.l.b16 %v63
    %v701 = vunpack.c.h.b16 %v63
    %v702 = vunpack.c.l.b16 %v64
    %v703 = vunpack.c.h.b16 %v64
    %v704 = vunpack.c.l.b16 %v65
    %v705 = vunpack.c.h.b16 %v65
    %v706 = vunpack.c.l.b16 %v66
    %v707 = vunpack.c.h.b16 %v66
    %v708 = vunpack.c.l.b16 %v67
    %v709 = vunpack.c.h.b16 %v67
    %v710 = vunpack.c.l.b16 %v68
    %v711 = vunpack.c.h.b16 %v68
    %v712 = vunpack.c.l.b16 %v69
    %v713 = vunpack.c.h.b16 %v69
    %v714 = vunpack.c.l.b16 %v70
    %v715 = vunpack.c.h.b16 %v70
    %v716 = vunpack.c.l.b16 %v71
    %v717 = vunpack.c.h.b16 %v71
    %v718 = vunpack.c.l.b16 %v72
    %v719 = vunpack.c.h.b16 %v72
    %v720 = vunpack.c.l.b16 %v73
    %v721 = vunpack.c.h.b16 %v73
    %v722 = vunpack.c.l.b16 %v74
    %v723 = vunpack.c.h.b16 %v74
    %v724 = vunpack.c.l.b16 %v75
    %v725 = vunpack.c.h.b16 %v75
    %v726 = vunpack.c.l.b16 %v76
    %v727 = vunpack.c.h.b16 %v76
    %v728 = vunpack.c.l.b16 %v77
    %v729 = vunpack.c.h.b16 %v77
    %v730 = vunpack.c.l.b16 %v78
    %v731 = vunpack.c.h.b16 %v78
    %v732 = vunpack.c.l.b16 %v79
    %v733 = vunpack.c.h.b16 %v79
    %v734 = vunpack.c.l.b16 %v80
    %v735 = vunpack.c.h.b16 %v80
    %v736 = vunpack.c.l.b16 %v81
    %v737 = vunpack.c.h.b16 %v81
    %v738 = vunpack.c.l.b16 %v82
    %v739 = vunpack.c.h.b16 %v82
    %v740 = vunpack.c.l.b16 %v83
    %v741 = vunpack.c.h.b16 %v83
    %v742 = vunpack.c.l.b16 %v84
    %v743 = vunpack.c.h.b16 %v84
    %v744 = vunpack.c.l.b16 %v85
    %v745 = vunpack.c.h.b16 %v85
    %v746 = vunpack.c.l.b16 %v86
    %v747 = vunpack.c.h.b16 %v86
    %v748 = vunpack.c.l.b16 %v87
    %v749 = vunpack.c.h.b16 %v87
    %v750 = vunpack.c.l.b16 %v88
    %v751 = vunpack.c.h.b16 %v88
    %v752 = vunpack.c.l.b16 %v89
    %v753 = vunpack.c.h.b16 %v89
    %v754 = vunpack.c.l.b16 %v90
    %v755 = vunpack.c.h.b16 %v90
    %v756 = vunpack.c.l.b16 %v91
    %v757 = vunpack.c.h.b16 %v91
    %v758 = vunpack.c.l.b16 %v92
    %v759 = vunpack.c.h.b16 %v92
    %v760 = vunpack.c.l.b16 %v93
    %v761 = vunpack.c.h.b16 %v93
    %v762 = vunpack.c.l.b16 %v94
    %v763 = vunpack.c.h.b16 %v94
    %v764 = vunpack.c.l.b16 %v95
    %v765 = vunpack.c.h.b16 %v95
    %v766 = vunpack.c.l.b16 %v96
    %v767 = vunpack.c.h.b16 %v96
    %v768 = vunpack.c.l.b16 %v97
    %v769 = vunpack.c.h.b16 %v97
    %v770 = vunpack.c.l.b16 %v98
    %v771 = vunpack.c.h.b16 %v98
    %v772 = vunpack.c.l.b16 %v99
    %v773 = vunpack.c.h.b16 %v99
    %v774 = vunpack.c.l.b16 %v100
    %v775 = vunpack.c.h.b16 %v100
    %v776 = vunpack.c.l.b16 %v101
    %v777 = vunpack.c.h.b16 %v101
    %v778 = vunpack.c.l.b16 %v102
    %v779 = vunpack.c.h.b16 %v102
    %v780 = vunpack.c.l.b16 %v103
    %v781 = vunpack.c.h.b16 %v103
    %v782 = vunpack.c.l.b16 %v104
    %v783 = vunpack.c.h.b16 %v104
    %v784 = vunpack.c.l.b16 %v105
    %v785 = vunpack.c.h.b16 %v105
    %v786 = vunpack.c.l.b16 %v106
    %v787 = vunpack.c.h.b16 %v106
    %v788 = vunpack.c.l.b16 %v107
    %v789 = vunpack.c.h.b16 %v107
    %v790 = vunpack.c.l.b16 %v108
    %v791 = vunpack.c.h.b16 %v108
    %v792 = vunpack.c.l.b16 %v109
    %v793 = vunpack.c.h.b16 %v109
    %v794 = vunpack.c.l.b16 %v110
    %v795 = vunpack.c.h.b16 %v110
    %v796 = vunpack.c.l.b16 %v111
    %v797 = vunpack.c.h.b16 %v111
    %v798 = vunpack.c.l.b16 %v112
    %v799 = vunpack.c.h.b16 %v112
    %v800 = vunpack.c.l.b16 %v113
    %v801 = vunpack.c.h.b16 %v113
    %v802 = vunpack.c.l.b16 %v114
    %v803 = vunpack.c.h.b16 %v114
    %v804 = vunpack.c.l.b16 %v115
    %v805 = vunpack.c.h.b16 %v115
    %v806 = vunpack.c.l.b16 %v116
    %v807 = vunpack.c.h.b16 %v116
    %v808 = vunpack.c.l.b16 %v117
    %v809 = vunpack.c.h.b16 %v117
    %v810 = vunpack.c.l.b16 %v118
    %v811 = vunpack.c.h.b16 %v118
    %v812 = vunpack.c.l.b16 %v119
    %v813 = vunpack.c.h.b16 %v119
    %v814 = vunpack.c.l.b16 %v120
    %v815 = vunpack.c.h.b16 %v120
    %v816 = vunpack.c.l.b16 %v121
    %v817 = vunpack.c.h.b16 %v121
    %v818 = vunpack.c.l.b16 %v122
    %v819 = vunpack.c.h.b16 %v122
    %v820 = vunpack.c.l.b16 %v123
    %v821 = vunpack.c.h.b16 %v123
    %v822 = vunpack.c.l.b16 %v124
    %v823 = vunpack.c.h.b16 %v124
    %v824 = vunpack.c.l.b16 %v125
    %v825 = vunpack.c.h.b16 %v125
    %v826 = vunpack.c.l.b16 %v126
    %v827 = vunpack.c.h.b16 %v126
    %v828 = vunpack.c.l.b16 %v127
    %v829 = vunpack.c.h.b16 %v127
    %v830 = vunpack.c.l.b16 %v128
    %v831 = vunpack.c.h.b16 %v128
    %v832 = vunpack.c.l.b16 %v129
    %v833 = vunpack.c.h.b16 %v129
    %v834 = vunpack.c.l.b16 %v130
    %v835 = vunpack.c.h.b16 %v130
    %v836 = vunpack.c.l.b16 %v131
    %v837 = vunpack.c.h.b16 %v131
    %v838 = vunpack.c.l.b16 %v132
    %v839 = vunpack.c.h.b16 %v132
    %v840 = vunpack.c.l.b16 %v133
    %v841 = vunpack.c.h.b16 %v133
    %v842 = vunpack.c.l.b16 %v134
    %v843 = vunpack.c.h.b16 %v134
    %v844 = vunpack.c.l.b16 %v135
    %v845 = vunpack.c.h.b16 %v135
    %v846 = vunpack.c.l.b16 %v136
    %v847 = vunpack.c.h.b16 %v136
    %v848 = vunpack.c.l.b16 %v137
    %v849 = vunpack.c.h.b16 %v137
    %v850 = vunpack.c.l.b16 %v138
    %v851 = vunpack.c.h.b16 %v138
    %v852 = vunpack.c.l.b16 %v139
    %v853 = vunpack.c.h.b16 %v139
    %v854 = vunpack.c.l.b16 %v140
    %v855 = vunpack.c.h.b16 %v140
    %v856 = vunpack.c.l.b16 %v141
    %v857 = vunpack.c.h.b16 %v141
    %v858 = vunpack.c.l.b16 %v142
    %v859 = vunpack.c.h.b16 %v142
    %v860 = vunpack.c.l.b16 %v143
    %v861 = vunpack.c.h.b16 %v143
    %v862 = vunpack.c.l.b16 %v144
    %v863 = vunpack.c.h.b16 %v144
    %v864 = vunpack.c.l.b16 %v145
    %v865 = vunpack.c.h.b16 %v145
    %v866 = vunpack.c.l.b16 %v146
    %v867 = vunpack.c.h.b16 %v146
    %v868 = vunpack.c.l.b16 %v147
    %v869 = vunpack.c.h.b16 %v147
    %v870 = vunpack.c.l.b16 %v148
    %v871 = vunpack.c.h.b16 %v148
    %v872 = vunpack.c.l.b16 %v149
    %v873 = vunpack.c.h.b16 %v149
    %v874 = vunpack.c.l.b16 %v150
    %v875 = vunpack.c.h.b16 %v150
    %v876 = vunpack.c.l.b16 %v151
    %v877 = vunpack.c.h.b16 %v151
    %v878 = vunpack.c.l.b16 %v152
    %v879 = vunpack.c.h.b16 %v152
    %v880 = vunpack.c.l.b16 %v153
    %v881 = vunpack.c.h.b16 %v153
    %v882 = vunpack.c.l.b16 %v154
    %v883 = vunpack.c.h.b16 %v154
    %v884 = vunpack.c.l.b16 %v155
    %v885 = vunpack.c.h.b16 %v155
    %v886 = vunpack.c.l.b16 %v156
    %v887 = vunpack.c.h.b16 %v156
    %v888 = vunpack.c.l.b16 %v157
    %v889 = vunpack.c.h.b16 %v157
    %v890 = vunpack.c.l.b16 %v158
    %v891 = vunpack.c.h.b16 %v158
    %v892 = vunpack.c.l.b16 %v159
    %v893 = vunpack.c.h.b16 %v159
    %v894 = vunpack.c.l.b16 %v160
    %v895 = vunpack.c.h.b16 %v160
    %v896 = vunpack.c.l.b16 %v161
    %v897 = vunpack.c.h.b16 %v161
    %v898 = vunpack.c.l.b16 %v162
    %v899 = vunpack.c.h.b16 %v162
    %v900 = vunpack.c.l.b16 %v163
    %v901 = vunpack.c.h.b16 %v163
    %v902 = vunpack.c.l.b16 %v164
    %v903 = vunpack.c.h.b16 %v164
    %v904 = vunpack.c.l.b16 %v165
    %v905 = vunpack.c.h.b16 %v165
    %v906 = vunpack.c.l.b16 %v166
    %v907 = vunpack.c.h.b16 %v166
    %v908 = vunpack.c.l.b16 %v167
    %v909 = vunpack.c.h.b16 %v167
    %v910 = vunpack.c.l.b16 %v168
    %v911 = vunpack.c.h.b16 %v168
    %v912 = vunpack.c.l.b16 %v169
    %v913 = vunpack.c.h.b16 %v169
    %v914 = vunpack.c.l.b16 %v170
    %v915 = vunpack.c.h.b16 %v170
    %v916 = vunpack.c.l.b16 %v171
    %v917 = vunpack.c.h.b16 %v171
    %v918 = vunpack.c.l.b16 %v172
    %v919 = vunpack.c.h.b16 %v172
    %v920 = vunpack.c.l.b16 %v173
    %v921 = vunpack.c.h.b16 %v173
    %v922 = vunpack.c.l.b16 %v174
    %v923 = vunpack.c.h.b16 %v174
    %v924 = vunpack.c.l.b16 %v175
    %v925 = vunpack.c.h.b16 %v175
    %v926 = vunpack.c.l.b16 %v176
    %v927 = vunpack.c.h.b16 %v176
    %v928 = vunpack.c.l.b16 %v177
    %v929 = vunpack.c.h.b16 %v177
    %v930 = vunpack.c.l.b16 %v178
    %v931 = vunpack.c.h.b16 %v178
    %v932 = vunpack.c.l.b16 %v179
    %v933 = vunpack.c.h.b16 %v179
    %v934 = vunpack.c.l.b16 %v180
    %v935 = vunpack.c.h.b16 %v180
    %v936 = vunpack.c.l.b16 %v181
    %v937 = vunpack.c.h.b16 %v181
    %v938 = vunpack.c.l.b16 %v182
    %v939 = vunpack.c.h.b16 %v182
    %v940 = vunpack.c.l.b16 %v183
    %v941 = vunpack.c.h.b16 %v183
    %v942 = vunpack.c.l.b16 %v184
    %v943 = vunpack.c.h.b16 %v184
    %v944 = vunpack.c.l.b16 %v185
    %v945 = vunpack.c.h.b16 %v185
    %v946 = vunpack.c.l.b16 %v186
    %v947 = vunpack.c.h.b16 %v186
    %v948 = vunpack.c.l.b16 %v187
    %v949 = vunpack.c.h.b16 %v187
    %v950 = vunpack.c.l.b16 %v188
    %v951 = vunpack.c.h.b16 %v188
    %v952 = vunpack.c.l.b16 %v189
    %v953 = vunpack.c.h.b16 %v189
    %v954 = vunpack.c.l.b16 %v190
    %v955 = vunpack.c.h.b16 %v190
    %v956 = vunpack.c.l.b16 %v191
    %v957 = vunpack.c.h.b16 %v191
    %v958 = vunpack.c.l.b16 %v192
    %v959 = vunpack.c.h.b16 %v192
    %v960 = vunpack.c.l.b16 %v193
    %v961 = vunpack.c.h.b16 %v193
    %v962 = vunpack.c.l.b16 %v194
    %v963 = vunpack.c.h.b16 %v194
    %v964 = vunpack.c.l.b16 %v195
    %v965 = vunpack.c.h.b16 %v195
    %v966 = vunpack.c.l.b16 %v196
    %v967 = vunpack.c.h.b16 %v196
    %v968 = vunpack.c.l.b16 %v197
    %v969 = vunpack.c.h.b16 %v197
    %v970 = vunpack.c.l.b16 %v198
    %v971 = vunpack.c.h.b16 %v198
    %v972 = vunpack.c.l.b16 %v199
    %v973 = vunpack.c.h.b16 %v199
    %v974 = vunpack.c.l.b16 %v200
    %v975 = vunpack.c.h.b16 %v200
    %v976 = vunpack.c.l.b16 %v201
    %v977 = vunpack.c.h.b16 %v201
    %v978 = vunpack.c.l.b16 %v202
    %v979 = vunpack.c.h.b16 %v202
    %v980 = vunpack.c.l.b16 %v203
    %v981 = vunpack.c.h.b16 %v203
    %v982 = vunpack.c.l.b16 %v204
    %v983 = vunpack.c.h.b16 %v204
    %v984 = vunpack.c.l.b16 %v205
    %v985 = vunpack.c.h.b16 %v205
    %v986 = vunpack.c.l.b16 %v206
    %v987 = vunpack.c.h.b16 %v206
    %v988 = vunpack.c.l.b16 %v207
    %v989 = vunpack.c.h.b16 %v207
    %v990 = vunpack.c.l.b16 %v208
    %v991 = vunpack.c.h.b16 %v208
    %v992 = vunpack.c.l.b16 %v209
    %v993 = vunpack.c.h.b16 %v209
    %v994 = vunpack.c.l.b16 %v210
    %v995 = vunpack.c.h.b16 %v210
    %v996 = vunpack.c.l.b16 %v211
    %v997 = vunpack.c.h.b16 %v211
    %v998 = vunpack.c.l.b16 %v212
    %v999 = vunpack.c.h.b16 %v212
    %v1000 = vunpack.c.l.b16 %v213
    %v1001 = vunpack.c.h.b16 %v213
    %v1002 = vunpack.c.l.b16 %v214
    %v1003 = vunpack.c.h.b16 %v214
    %v1004 = vunpack.c.l.b16 %v215
    %v1005 = vunpack.c.h.b16 %v215
    %v1006 = vunpack.c.l.b16 %v216
    %v1007 = vunpack.c.h.b16 %v216
    %v1008 = vunpack.c.l.b16 %v217
    %v1009 = vunpack.c.h.b16 %v217
    %v1010 = vunpack.c.l.b16 %v218
    %v1011 = vunpack.c.h.b16 %v218
    %v1012 = vunpack.c.l.b16 %v219
    %v1013 = vunpack.c.h.b16 %v219
    %v1014 = vunpack.c.l.b16 %v220
    %v1015 = vunpack.c.h.b16 %v220
    %v1016 = vunpack.c.l.b16 %v221
    %v1017 = vunpack.c.h.b16 %v221
    %v1018 = vunpack.c.l.b16 %v222
    %v1019 = vunpack.c.h.b16 %v222
    %v1020 = vunpack.c.l.b16 %v223
    %v1021 = vunpack.c.h.b16 %v223
    %v1022 = vunpack.c.l.b16 %v224
    %v1023 = vunpack.c.h.b16 %v224
    %v1024 = vunpack.c.l.b16 %v225
    %v1025 = vunpack.c.h.b16 %v225
    %v1026 = vunpack.c.l.b16 %v226
    %v1027 = vunpack.c.h.b16 %v226
    %v1028 = vunpack.c.l.b16 %v227
    %v1029 = vunpack.c.h.b16 %v227
    %v1030 = vunpack.c.l.b16 %v228
    %v1031 = vunpack.c.h.b16 %v228
    %v1032 = vunpack.c.l.b16 %v229
    %v1033 = vunpack.c.h.b16 %v229
    %v1034 = vunpack.c.l.b16 %v230
    %v1035 = vunpack.c.h.b16 %v230
    %v1036 = vunpack.c.l.b16 %v231
    %v1037 = vunpack.c.h.b16 %v231
    %v1038 = vunpack.c.l.b16 %v232
    %v1039 = vunpack.c.h.b16 %v232
    %v1040 = vunpack.c.l.b16 %v233
    %v1041 = vunpack.c.h.b16 %v233
    %v1042 = vunpack.c.l.b16 %v234
    %v1043 = vunpack.c.h.b16 %v234
    %v1044 = vunpack.c.l.b16 %v235
    %v1045 = vunpack.c.h.b16 %v235
    %v1046 = vunpack.c.l.b16 %v236
    %v1047 = vunpack.c.h.b16 %v236
    %v1048 = vunpack.c.l.b16 %v237
    %v1049 = vunpack.c.h.b16 %v237
    %v1050 = vunpack.c.l.b16 %v238
    %v1051 = vunpack.c.h.b16 %v238
    %v1052 = vunpack.c.l.b16 %v239
    %v1053 = vunpack.c.h.b16 %v239
    %v1054 = vunpack.c.l.b16 %v240
    %v1055 = vunpack.c.h.b16 %v240
    %v1056 = vunpack.c.l.b16 %v241
    %v1057 = vunpack.c.h.b16 %v241
    %v1058 = vunpack.c.l.b16 %v242
    %v1059 = vunpack.c.h.b16 %v242
    %v1060 = vunpack.c.l.b16 %v243
    %v1061 = vunpack.c.h.b16 %v243
    %v1062 = vunpack.c.l.b16 %v244
    %v1063 = vunpack.c.h.b16 %v244
    %v1064 = vunpack.c.l.b16 %v245
    %v1065 = vunpack.c.h.b16 %v245
    %v1066 = vunpack.c.l.b16 %v246
    %v1067 = vunpack.c.h.b16 %v246
    %v1068 = vunpack.c.l.b16 %v247
    %v1069 = vunpack.c.h.b16 %v247
    %v1070 = vunpack.c.l.b16 %v248
    %v1071 = vunpack.c.h.b16 %v248
    %v1072 = vunpack.c.l.b16 %v249
    %v1073 = vunpack.c.h.b16 %v249
    %v1074 = vunpack.c.l.b16 %v250
    %v1075 = vunpack.c.h.b16 %v250
    %v1076 = vunpack.c.l.b16 %v251
    %v1077 = vunpack.c.h.b16 %v251
    %v1078 = vunpack.c.l.b16 %v252
    %v1079 = vunpack.c.h.b16 %v252
    %v1080 = vunpack.c.l.b16 %v253
    %v1081 = vunpack.c.h.b16 %v253
    %v1082 = vunpack.c.l.b16 %v254
    %v1083 = vunpack.c.h.b16 %v254
    %v1084 = vunpack.c.l.b16 %v255
    %v1085 = vunpack.c.h.b16 %v255
    %v1086 = vunpack.c.l.b16 %v256
    %v1087 = vunpack.c.h.b16 %v256
    %v1088 = vunpack.c.l.b16 %v257
    %v1089 = vunpack.c.h.b16 %v257
    %v1090 = vunpack.c.l.b16 %v258
    %v1091 = vunpack.c.h.b16 %v258
    %v1092 = vunpack.c.l.b16 %v259
    %v1093 = vunpack.c.h.b16 %v259
    %v1094 = vunpack.c.l.b16 %v260
    %v1095 = vunpack.c.h.b16 %v260
    %v1096 = vunpack.c.l.b16 %v261
    %v1097 = vunpack.c.h.b16 %v261
    %v1098 = vunpack.c.l.b16 %v262
    %v1099 = vunpack.c.h.b16 %v262
    %v1100 = vunpack.c.l.b16 %v263
    %v1101 = vunpack.c.h.b16 %v263
    %v1102 = vunpack.c.l.b16 %v264
    %v1103 = vunpack.c.h.b16 %v264
    %v1104 = vunpack.c.l.b16 %v265
    %v1105 = vunpack.c.h.b16 %v265
    %v1106 = vunpack.c.l.b16 %v266
    %v1107 = vunpack.c.h.b16 %v266
    %v1108 = vunpack.c.l.b16 %v267
    %v1109 = vunpack.c.h.b16 %v267
    %v1110 = vunpack.c.l.b16 %v268
    %v1111 = vunpack.c.h.b16 %v268
    %v1112 = vunpack.c.l.b16 %v269
    %v1113 = vunpack.c.h.b16 %v269
    %v1114 = vunpack.c.l.b16 %v270
    %v1115 = vunpack.c.h.b16 %v270
    %v1116 = vunpack.c.l.b16 %v271
    %v1117 = vunpack.c.h.b16 %v271
    %v1118 = vunpack.c.l.b16 %v272
    %v1119 = vunpack.c.h.b16 %v272
    %v1120 = vunpack.c.l.b16 %v273
    %v1121 = vunpack.c.h.b16 %v273
    %v1122 = vunpack.c.l.b16 %v274
    %v1123 = vunpack.c.h.b16 %v274
    %v1124 = vunpack.c.l.b16 %v275
    %v1125 = vunpack.c.h.b16 %v275
    %v1126 = vunpack.c.l.b16 %v276
    %v1127 = vunpack.c.h.b16 %v276
    %v1128 = vunpack.c.l.b16 %v277
    %v1129 = vunpack.c.h.b16 %v277
    %v1130 = vunpack.c.l.b16 %v278
    %v1131 = vunpack.c.h.b16 %v278
    %v1132 = vunpack.c.l.b16 %v279
    %v1133 = vunpack.c.h.b16 %v279
    %v1134 = vunpack.c.l.b16 %v280
    %v1135 = vunpack.c.h.b16 %v280
    %v1136 = vunpack.c.l.b16 %v281
    %v1137 = vunpack.c.h.b16 %v281
    %v1138 = vunpack.c.l.b16 %v282
    %v1139 = vunpack.c.h.b16 %v282
    %v1140 = vunpack.c.l.b16 %v283
    %v1141 = vunpack.c.h.b16 %v283
    %v1142 = vunpack.c.l.b16 %v284
    %v1143 = vunpack.c.h.b16 %v284
    %v1144 = vunpack.c.l.b16 %v285
    %v1145 = vunpack.c.h.b16 %v285
    %v1146 = vunpack.c.l.b16 %v286
    %v1147 = vunpack.c.h.b16 %v286
    %v1148 = vunpack.c.l.b16 %v287
    %v1149 = vunpack.c.h.b16 %v287
    %v1150 = vunpack.c.l.b16 %v288
    %v1151 = vunpack.c.h.b16 %v288
    %v1152 = vunpack.c.l.b16 %v289
    %v1153 = vunpack.c.h.b16 %v289
    %v1154 = vunpack.c.l.b16 %v290
    %v1155 = vunpack.c.h.b16 %v290
    %v1156 = vunpack.c.l.b16 %v291
    %v1157 = vunpack.c.h.b16 %v291
    %v1158 = vunpack.c.l.b16 %v292
    %v1159 = vunpack.c.h.b16 %v292
    %v1160 = vunpack.c.l.b16 %v293
    %v1161 = vunpack.c.h.b16 %v293
    %v1162 = vunpack.c.l.b16 %v294
    %v1163 = vunpack.c.h.b16 %v294
    %v1164 = vunpack.c.l.b16 %v295
    %v1165 = vunpack.c.h.b16 %v295
    %v1166 = vunpack.c.l.b16 %v296
    %v1167 = vunpack.c.h.b16 %v296
    %v1168 = vunpack.c.l.b16 %v297
    %v1169 = vunpack.c.h.b16 %v297
    %v1170 = vunpack.c.l.b16 %v298
    %v1171 = vunpack.c.h.b16 %v298
    %v1172 = vunpack.c.l.b16 %v299
    %v1173 = vunpack.c.h.b16 %v299
    %v1174 = vunpack.c.l.b16 %v300
    %v1175 = vunpack.c.h.b16 %v300
    %v1176 = vunpack.c.l.b16 %v301
    %v1177 = vunpack.c.h.b16 %v301
    %v1178 = vunpack.c.l.b16 %v302
    %v1179 = vunpack.c.h.b16 %v302
    %v1180 = vunpack.c.l.b16 %v303
    %v1181 = vunpack.c.h.b16 %v303
    %v1182 = vunpack.c.l.b16 %v304
    %v1183 = vunpack.c.h.b16 %v304
    %v1184 = vunpack.c.l.b16 %v305
    %v1185 = vunpack.c.h.b16 %v305
    %v1186 = vunpack.c.l.b16 %v306
    %v1187 = vunpack.c.h.b16 %v306
    %v1188 = vunpack.c.l.b16 %v307
    %v1189 = vunpack.c.h.b16 %v307
    %v1190 = vunpack.c.l.b16 %v308
    %v1191 = vunpack.c.h.b16 %v308
    %v1192 = vunpack.c.l.b16 %v309
    %v1193 = vunpack.c.h.b16 %v309
    %v1194 = vunpack.c.l.b16 %v310
    %v1195 = vunpack.c.h.b16 %v310
    %v1196 = vunpack.c.l.b16 %v311
    %v1197 = vunpack.c.h.b16 %v311
    %v1198 = vunpack.c.l.b16 %v312
    %v1199 = vunpack.c.h.b16 %v312
    %v1200 = vunpack.c.l.b16 %v313
    %v1201 = vunpack.c.h.b16 %v313
    %v1202 = vunpack.c.l.b16 %v314
    %v1203 = vunpack.c.h.b16 %v314
    %v1204 = vunpack.c.l.b16 %v315
    %v1205 = vunpack.c.h.b16 %v315
    %v1206 = vunpack.c.l.b16 %v316
    %v1207 = vunpack.c.h.b16 %v316
    %v1208 = vunpack.c.l.b16 %v317
    %v1209 = vunpack.c.h.b16 %v317
    %v1210 = vunpack.c.l.b16 %v318
    %v1211 = vunpack.c.h.b16 %v318
    %v1212 = vunpack.c.l.b16 %v319
    %v1213 = vunpack.c.h.b16 %v319
    %v1214 = vunpack.c.l.b16 %v320
    %v1215 = vunpack.c.h.b16 %v320
    %v1216 = vunpack.c.l.b16 %v321
    %v1217 = vunpack.c.h.b16 %v321
    %v1218 = vunpack.c.l.b16 %v322
    %v1219 = vunpack.c.h.b16 %v322
    %v1220 = vunpack.c.l.b16 %v323
    %v1221 = vunpack.c.h.b16 %v323
    %v1222 = vunpack.c.l.b16 %v324
    %v1223 = vunpack.c.h.b16 %v324
    %v1224 = vunpack.c.l.b16 %v325
    %v1225 = vunpack.c.h.b16 %v325
    %v1226 = vunpack.c.l.b16 %v326
    %v1227 = vunpack.c.h.b16 %v326
    %v1228 = vunpack.c.l.b16 %v327
    %v1229 = vunpack.c.h.b16 %v327
    %v1230 = vunpack.c.l.b16 %v328
    %v1231 = vunpack.c.h.b16 %v328
    %v1232 = vunpack.c.l.b16 %v329
    %v1233 = vunpack.c.h.b16 %v329
    %v1234 = vunpack.c.l.b16 %v330
    %v1235 = vunpack.c.h.b16 %v330
    %v1236 = vunpack.c.l.b16 %v331
    %v1237 = vunpack.c.h.b16 %v331
    %v1238 = vunpack.c.l.b16 %v332
    %v1239 = vunpack.c.h.b16 %v332
    %v1240 = vunpack.c.l.b16 %v333
    %v1241 = vunpack.c.h.b16 %v333
    %v1242 = vunpack.c.l.b16 %v334
    %v1243 = vunpack.c.h.b16 %v334
    %v1244 = vunpack.c.l.b16 %v335
    %v1245 = vunpack.c.h.b16 %v335
    %v1246 = vunpack.c.l.b16 %v336
    %v1247 = vunpack.c.h.b16 %v336
    %v1248 = vunpack.c.l.b16 %v337
    %v1249 = vunpack.c.h.b16 %v337
    %v1250 = vunpack.c.l.b16 %v338
    %v1251 = vunpack.c.h.b16 %v338
    %v1252 = vunpack.c.l.b16 %v339
    %v1253 = vunpack.c.h.b16 %v339
    %v1254 = vunpack.c.l.b16 %v340
    %v1255 = vunpack.c.h.b16 %v340
    %v1256 = vunpack.c.l.b16 %v341
    %v1257 = vunpack.c.h.b16 %v341
    %v1258 = vunpack.c.l.b16 %v342
    %v1259 = vunpack.c.h.b16 %v342
    %v1260 = vpack.c.b16 %v690, %v684
    %v1261 = vpack.c.b16 %v691, %v685
    %v1262 = vpack.c.b16 %v692, %v686
    %v1263 = vpack.c.b16 %v693, %v687
    %v1264 = vpack.c.b16 %v694, %v688
    %v1265 = vpack.c.b16 %v695, %v689
    %v1266 = vpack.c.b16 %v702, %v696
    %v1267 = vpack.c.b16 %v703, %v697
    %v1268 = vpack.c.b16 %v704, %v698
    %v1269 = vpack.c.b16 %v705, %v699
    %v1270 = vpack.c.b16 %v706, %v700
    %v1271 = vpack.c.b16 %v707, %v701
    %v1272 = vpack.c.b16 %v714, %v708
    %v1273 = vpack.c.b16 %v715, %v709
    %v1274 = vpack.c.b16 %v716, %v710
    %v1275 = vpack.c.b16 %v717, %v711
    %v1276 = vpack.c.b16 %v718, %v712
    %v1277 = vpack.c.b16 %v719, %v713
    %v1278 = vpack.c.b16 %v726, %v720
    %v1279 = vpack.c.b16 %v727, %v721
    %v1280 = vpack.c.b16 %v728, %v722
    %v1281 = vpack.c.b16 %v729, %v723
    %v1282 = vpack.c.b16 %v730, %v724
    %v1283 = vpack.c.b16 %v731, %v725
    %v1284 = vpack.c.b16 %v738, %v732
    %v1285 = vpack.c.b16 %v739, %v733
    %v1286 = vpack.c.b16 %v740, %v734
    %v1287 = vpack.c.b16 %v741, %v735
    %v1288 = vpack.c.b16 %v742, %v736
    %v1289 = vpack.c.b16 %v743, %v737
    %v1290 = vpack.c.b16 %v750, %v744
    %v1291 = vpack.c.b16 %v751, %v745
    %v1292 = vpack.c.b16 %v752, %v746
    %v1293 = vpack.c.b16 %v753, %v747
    %v1294 = vpack.c.b16 %v754, %v748
    %v1295 = vpack.c.b16 %v755, %v749
    %v1296 = vpack.c.b16 %v762, %v756
    %v1297 = vpack.c.b16 %v763, %v757
    %v1298 = vpack.c.b16 %v764, %v758
    %v1299 = vpack.c.b16 %v765, %v759
    %v1300 = vpack.c.b16 %v766, %v760
    %v1301 = vpack.c.b16 %v767, %v761
    %v1302 = vpack.c.b16 %v774, %v768
    %v1303 = vpack.c.b16 %v775, %v769
    %v1304 = vpack.c.b16 %v776, %v770
    %v1305 = vpack.c.b16 %v777, %v771
    %v1306 = vpack.c.b16 %v778, %v772
    %v1307 = vpack.c.b16 %v779, %v773
    %v1308 = vpack.c.b16 %v786, %v780
    %v1309 = vpack.c.b16 %v787, %v781
    %v1310 = vpack.c.b16 %v788, %v782
    %v1311 = vpack.c.b16 %v789, %v783
    %v1312 = vpack.c.b16 %v790, %v784
    %v1313 = vpack.c.b16 %v791, %v785
    %v1314 = vpack.c.b16 %v798, %v792
    %v1315 = vpack.c.b16 %v799, %v793
    %v1316 = vpack.c.b16 %v800, %v794
    %v1317 = vpack.c.b16 %v801, %v795
    %v1318 = vpack.c.b16 %v802, %v796
    %v1319 = vpack.c.b16 %v803, %v797
    %v1320 = vpack.c.b16 %v810, %v804
    %v1321 = vpack.c.b16 %v811, %v805
    %v1322 = vpack.c.b16 %v812, %v806
    %v1323 = vpack.c.b16 %v813, %v807
    %v1324 = vpack.c.b16 %v814, %v808
    %v1325 = vpack.c.b16 %v815, %v809
    %v1326 = vpack.c.b16 %v822, %v816
    %v1327 = vpack.c.b16 %v823, %v817
    %v1328 = vpack.c.b16 %v824, %v818
    %v1329 = vpack.c.b16 %v825, %v819
    %v1330 = vpack.c.b16 %v826, %v820
    %v1331 = vpack.c.b16 %v827, %v821
    %v1332 = vpack.c.b16 %v834, %v828
    %v1333 = vpack.c.b16 %v835, %v829
    %v1334 = vpack.c.b16 %v836, %v830
    %v1335 = vpack.c.b16 %v837, %v831
    %v1336 = vpack.c.b16 %v838, %v832
    %v1337 = vpack.c.b16 %v839, %v833
    %v1338 = vpack.c.b16 %v846, %v840
    %v1339 = vpack.c.b16 %v847, %v841
    %v1340 = vpack.c.b16 %v848, %v842
    %v1341 = vpack.c.b16 %v849, %v843
    %v1342 = vpack.c.b16 %v850, %v844
    %v1343 = vpack.c.b16 %v851, %v845
    %v1344 = vpack.c.b16 %v858, %v852
    %v1345 = vpack.c.b16 %v859, %v853
    %v1346 = vpack.c.b16 %v860, %v854
    %v1347 = vpack.c.b16 %v861, %v855
    %v1348 = vpack.c.b16 %v862, %v856
    %v1349 = vpack.c.b16 %v863, %v857
    %v1350 = vpack.c.b16 %v870, %v864
    %v1351 = vpack.c.b16 %v871, %v865
    %v1352 = vpack.c.b16 %v872, %v866
    %v1353 = vpack.c.b16 %v873, %v867
    %v1354 = vpack.c.b16 %v874, %v868
    %v1355 = vpack.c.b16 %v875, %v869
    %v1356 = vpack.c.b16 %v882, %v876
    %v1357 = vpack.c.b16 %v883, %v877
    %v1358 = vpack.c.b16 %v884, %v878
    %v1359 = vpack.c.b16 %v885, %v879
    %v1360 = vpack.c.b16 %v886, %v880
    %v1361 = vpack.c.b16 %v887, %v881
    %v1362 = vpack.c.b16 %v894, %v888
    %v1363 = vpack.c.b16 %v895, %v889
    %v1364 = vpack.c.b16 %v896, %v890
    %v1365 = vpack.c.b16 %v897, %v891
    %v1366 = vpack.c.b16 %v898, %v892
    %v1367 = vpack.c.b16 %v899, %v893
    %v1368 = vpack.c.b16 %v906, %v900
    %v1369 = vpack.c.b16 %v907, %v901
    %v1370 = vpack.c.b16 %v908, %v902
    %v1371 = vpack.c.b16 %v909, %v903
    %v1372 = vpack.c.b16 %v910, %v904
    %v1373 = vpack.c.b16 %v911, %v905
    %v1374 = vpack.c.b16 %v918, %v912
    %v1375 = vpack.c.b16 %v919, %v913
    %v1376 = vpack.c.b16 %v920, %v914
    %v1377 = vpack.c.b16 %v921, %v915
    %v1378 = vpack.c.b16 %v922, %v916
    %v1379 = vpack.c.b16 %v923, %v917
    %v1380 = vpack.c.b16 %v930, %v924
    %v1381 = vpack.c.b16 %v931, %v925
    %v1382 = vpack.c.b16 %v932, %v926
    %v1383 = vpack.c.b16 %v933, %v927
    %v1384 = vpack.c.b16 %v934, %v928
    %v1385 = vpack.c.b16 %v935, %v929
    %v1386 = vpack.c.b16 %v942, %v936
    %v1387 = vpack.c.b16 %v943, %v937
    %v1388 = vpack.c.b16 %v944, %v938
    %v1389 = vpack.c.b16 %v945, %v939
    %v1390 = vpack.c.b16 %v946, %v940
    %v1391 = vpack.c.b16 %v947, %v941
    %v1392 = vpack.c.b16 %v954, %v948
    %v1393 = vpack.c.b16 %v955, %v949
    %v1394 = vpack.c.b16 %v956, %v950
    %v1395 = vpack.c.b16 %v957, %v951
    %v1396 = vpack.c.b16 %v958, %v952
    %v1397 = vpack.c.b16 %v959, %v953
    %v1398 = vpack.c.b16 %v966, %v960
    %v1399 = vpack.c.b16 %v967, %v961
    %v1400 = vpack.c.b16 %v968, %v962
    %v1401 = vpack.c.b16 %v969, %v963
    %v1402 = vpack.c.b16 %v970, %v964
    %v1403 = vpack.c.b16 %v971, %v965
    %v1404 = vpack.c.b16 %v978, %v972
    %v1405 = vpack.c.b16 %v979, %v973
    %v1406 = vpack.c.b16 %v980, %v974
    %v1407 = vpack.c.b16 %v981, %v975
    %v1408 = vpack.c.b16 %v982, %v976
    %v1409 = vpack.c.b16 %v983, %v977
    %v1410 = vpack.c.b16 %v990, %v984
    %v1411 = vpack.c.b16 %v991, %v985
    %v1412 = vpack.c.b16 %v992, %v986
    %v1413 = vpack.c.b16 %v993, %v987
    %v1414 = vpack.c.b16 %v994, %v988
    %v1415 = vpack.c.b16 %v995, %v989
    %v1416 = vpack.c.b16 %v1002, %v996
    %v1417 = vpack.c.b16 %v1003, %v997
    %v1418 = vpack.c.b16 %v1004, %v998
    %v1419 = vpack.c.b16 %v1005, %v999
    %v1420 = vpack.c.b16 %v1006, %v1000
    %v1421 = vpack.c.b16 %v1007, %v1001
    %v1422 = vpack.c.b16 %v1014, %v1008
    %v1423 = vpack.c.b16 %v1015, %v1009
    %v1424 = vpack.c.b16 %v1016, %v1010
    %v1425 = vpack.c.b16 %v1017, %v1011
    %v1426 = vpack.c.b16 %v1018, %v1012
    %v1427 = vpack.c.b16 %v1019, %v1013
    %v1428 = vpack.c.b16 %v1026, %v1020
    %v1429 = vpack.c.b16 %v1027, %v1021
    %v1430 = vpack.c.b16 %v1028, %v1022
    %v1431 = vpack.c.b16 %v1029, %v1023
    %v1432 = vpack.c.b16 %v1030, %v1024
    %v1433 = vpack.c.b16 %v1031, %v1025
    %v1434 = vpack.c.b16 %v1038, %v1032
    %v1435 = vpack.c.b16 %v1039, %v1033
    %v1436 = vpack.c.b16 %v1040, %v1034
    %v1437 = vpack.c.b16 %v1041, %v1035
    %v1438 = vpack.c.b16 %v1042, %v1036
    %v1439 = vpack.c.b16 %v1043, %v1037
    %v1440 = vpack.c.b16 %v1050, %v1044
    %v1441 = vpack.c.b16 %v1051, %v1045
    %v1442 = vpack.c.b16 %v1052, %v1046
    %v1443 = vpack.c.b16 %v1053, %v1047
    %v1444 = vpack.c.b16 %v1054, %v1048
    %v1445 = vpack.c.b16 %v1055, %v1049
    %v1446 = vpack.c.b16 %v1062, %v1056
    %v1447 = vpack.c.b16 %v1063, %v1057
    %v1448 = vpack.c.b16 %v1064, %v1058
    %v1449 = vpack.c.b16 %v1065, %v1059
    %v1450 = vpack.c.b16 %v1066, %v1060
    %v1451 = vpack.c.b16 %v1067, %v1061
    %v1452 = vpack.c.b16 %v1074, %v1068
    %v1453 = vpack.c.b16 %v1075, %v1069
    %v1454 = vpack.c.b16 %v1076, %v1070
    %v1455 = vpack.c.b16 %v1077, %v1071
    %v1456 = vpack.c.b16 %v1078, %v1072
    %v1457 = vpack.c.b16 %v1079, %v1073
    %v1458 = vpack.c.b16 %v1086, %v1080
    %v1459 = vpack.c.b16 %v1087, %v1081
    %v1460 = vpack.c.b16 %v1088, %v1082
    %v1461 = vpack.c.b16 %v1089, %v1083
    %v1462 = vpack.c.b16 %v1090, %v1084
    %v1463 = vpack.c.b16 %v1091, %v1085
    %v1464 = vpack.c.b16 %v1098, %v1092
    %v1465 = vpack.c.b16 %v1099, %v1093
    %v1466 = vpack.c.b16 %v1100, %v1094
    %v1467 = vpack.c.b16 %v1101, %v1095
    %v1468 = vpack.c.b16 %v1102, %v1096
    %v1469 = vpack.c.b16 %v1103, %v1097
    %v1470 = vpack.c.b16 %v1110, %v1104
    %v1471 = vpack.c.b16 %v1111, %v1105
    %v1472 = vpack.c.b16 %v1112, %v1106
    %v1473 = vpack.c.b16 %v1113, %v1107
    %v1474 = vpack.c.b16 %v1114, %v1108
    %v1475 = vpack.c.b16 %v1115, %v1109
    %v1476 = vpack.c.b16 %v1122, %v1116
    %v1477 = vpack.c.b16 %v1123, %v1117
    %v1478 = vpack.c.b16 %v1124, %v1118
    %v1479 = vpack.c.b16 %v1125, %v1119
    %v1480 = vpack.c.b16 %v1126, %v1120
    %v1481 = vpack.c.b16 %v1127, %v1121
    %v1482 = vpack.c.b16 %v1134, %v1128
    %v1483 = vpack.c.b16 %v1135, %v1129
    %v1484 = vpack.c.b16 %v1136, %v1130
    %v1485 = vpack.c.b16 %v1137, %v1131
    %v1486 = vpack.c.b16 %v1138, %v1132
    %v1487 = vpack.c.b16 %v1139, %v1133
    %v1488 = vpack.c.b16 %v1146, %v1140
    %v1489 = vpack.c.b16 %v1147, %v1141
    %v1490 = vpack.c.b16 %v1148, %v1142
    %v1491 = vpack.c.b16 %v1149, %v1143
    %v1492 = vpack.c.b16 %v1150, %v1144
    %v1493 = vpack.c.b16 %v1151, %v1145
    %v1494 = vpack.c.b16 %v1158, %v1152
    %v1495 = vpack.c.b16 %v1159, %v1153
    %v1496 = vpack.c.b16 %v1160, %v1154
    %v1497 = vpack.c.b16 %v1161, %v1155
    %v1498 = vpack.c.b16 %v1162, %v1156
    %v1499 = vpack.c.b16 %v1163, %v1157
    %v1500 = vpack.c.b16 %v1170, %v1164
    %v1501 = vpack.c.b16 %v1171, %v1165
    %v1502 = vpack.c.b16 %v1172, %v1166
    %v1503 = vpack.c.b16 %v1173, %v1167
    %v1504 = vpack.c.b16 %v1174, %v1168
    %v1505 = vpack.c.b16 %v1175, %v1169
    %v1506 = vpack.c.b16 %v1182, %v1176
    %v1507 = vpack.c.b16 %v1183, %v1177
    %v1508 = vpack.c.b16 %v1184, %v1178
    %v1509 = vpack.c.b16 %v1185, %v1179
    %v1510 = vpack.c.b16 %v1186, %v1180
    %v1511 = vpack.c.b16 %v1187, %v1181
    %v1512 = vpack.c.b16 %v1194, %v1188
    %v1513 = vpack.c.b16 %v1195, %v1189
    %v1514 = vpack.c.b16 %v1196, %v1190
    %v1515 = vpack.c.b16 %v1197, %v1191
    %v1516 = vpack.c.b16 %v1198, %v1192
    %v1517 = vpack.c.b16 %v1199, %v1193
    %v1518 = vpack.c.b16 %v1206, %v1200
    %v1519 = vpack.c.b16 %v1207, %v1201
    %v1520 = vpack.c.b16 %v1208, %v1202
    %v1521 = vpack.c.b16 %v1209, %v1203
    %v1522 = vpack.c.b16 %v1210, %v1204
    %v1523 = vpack.c.b16 %v1211, %v1205
    %v1524 = vpack.c.b16 %v1218, %v1212
    %v1525 = vpack.c.b16 %v1219, %v1213
    %v1526 = vpack.c.b16 %v1220, %v1214
    %v1527 = vpack.c.b16 %v1221, %v1215
    %v1528 = vpack.c.b16 %v1222, %v1216
    %v1529 = vpack.c.b16 %v1223, %v1217
    %v1530 = vpack.c.b16 %v1230, %v1224
    %v1531 = vpack.c.b16 %v1231, %v1225
    %v1532 = vpack.c.b16 %v1232, %v1226
    %v1533 = vpack.c.b16 %v1233, %v1227
    %v1534 = vpack.c.b16 %v1234, %v1228
    %v1535 = vpack.c.b16 %v1235, %v1229
    %v1536 = vpack.c.b16 %v1242, %v1236
    %v1537 = vpack.c.b16 %v1243, %v1237
    %v1538 = vpack.c.b16 %v1244, %v1238
    %v1539 = vpack.c.b16 %v1245, %v1239
    %v1540 = vpack.c.b16 %v1246, %v1240
    %v1541 = vpack.c.b16 %v1247, %v1241
    %v1542 = vpack.c.b16 %v1254, %v1248
    %v1543 = vpack.c.b16 %v1255, %v1249
    %v1544 = vpack.c.b16 %v1256, %v1250
    %v1545 = vpack.c.b16 %v1257, %v1251
    %v1546 = vpack.c.b16 %v1258, %v1252
    %v1547 = vpack.c.b16 %v1259, %v1253
    %1836 = vmatprep.subr.bf16.mxu0 %v1303
    %1837 = vmatpush1.bf16.msra.mxu0 %v1302
    %1838 = vmatprep.subr.bf16.mxu0 %v1297
    %1839 = vmatpush1.bf16.msra.mxu0 %v1296
    %1840 = vmatprep.subr.bf16.mxu0 %v1291
    %1841 = vmatpush1.bf16.msra.mxu0 %v1290
    %1842 = vmatprep.subr.bf16.mxu0 %v1285
    %1843 = vmatpush1.bf16.msra.mxu0 %v1284
    %1844 = vmatprep.subr.bf16.mxu0 %v1279
    %1845 = vmatpush1.bf16.msra.mxu0 %v1278
    %1846 = vmatprep.subr.bf16.mxu0 %v1273
    %1847 = vmatpush1.bf16.msra.mxu0 %v1272
    %1848 = vmatprep.subr.bf16.mxu0 %v1267
    %1849 = vmatpush1.bf16.msra.mxu0 %v1266
    %1850 = vmatprep.subr.bf16.mxu0 %v1261
    %1851 = vmatpush1.bf16.msra.mxu0 %v1260
    %1852 = vmatprep.subr.bf16.mxu0 %v1351
    %1853 = vmatpush2.bf16.msra.mxu0 %v1350
    %1854 = vmatprep.subr.bf16.mxu0 %v1345
    %1855 = vmatpush2.bf16.msra.mxu0 %v1344
    %1856 = vmatprep.subr.bf16.mxu0 %v1339
    %1857 = vmatpush2.bf16.msra.mxu0 %v1338
    %1858 = vmatprep.subr.bf16.mxu0 %v1333
    %1859 = vmatpush2.bf16.msra.mxu0 %v1332
    %1860 = vmatprep.subr.bf16.mxu0 %v1327
    %1861 = vmatpush2.bf16.msra.mxu0 %v1326
    %1862 = vmatprep.subr.bf16.mxu0 %v1321
    %1863 = vmatpush2.bf16.msra.mxu0 %v1320
    %1864 = vmatprep.subr.bf16.mxu0 %v1315
    %1865 = vmatpush2.bf16.msra.mxu0 %v1314
    %1866 = vmatprep.subr.bf16.mxu0 %v1309
    %1867 = vmatpush2.bf16.msra.mxu0 %v1308
    %1868 = vmatprep.mubr.bf16.mxu0 %v385
    %1869 = vmatmul.mubr.bf16.gmra.mxu0 %v384
    %v1870 = vpop.f32.mrf.mxu0
    %v1871 = vadd.f32 %v348, %v1870
    %v1872 = vpop.f32.mrf.mxu0
    %v1873 = vadd.f32 %v352, %v1872
    %v1874 = vpop.f32.mrf.mxu0
    %v1875 = vpop.f32.mrf.mxu0
    %1876 = vdwg.mxu0
    %1877 = vmatprep.subr.bf16.mxu0 %v1399
    %1878 = vmatpush1.bf16.msra.mxu0 %v1398
    %1879 = vmatprep.subr.bf16.mxu0 %v1393
    %1880 = vmatpush1.bf16.msra.mxu0 %v1392
    %1881 = vmatprep.subr.bf16.mxu0 %v1387
    %1882 = vmatpush1.bf16.msra.mxu0 %v1386
    %1883 = vmatprep.subr.bf16.mxu0 %v1381
    %1884 = vmatpush1.bf16.msra.mxu0 %v1380
    %1885 = vmatprep.subr.bf16.mxu0 %v1375
    %1886 = vmatpush1.bf16.msra.mxu0 %v1374
    %1887 = vmatprep.subr.bf16.mxu0 %v1369
    %1888 = vmatpush1.bf16.msra.mxu0 %v1368
    %1889 = vmatprep.subr.bf16.mxu0 %v1363
    %1890 = vmatpush1.bf16.msra.mxu0 %v1362
    %1891 = vmatprep.subr.bf16.mxu0 %v1357
    %1892 = vmatpush1.bf16.msra.mxu0 %v1356
    %1893 = vmatprep.subr.bf16.mxu0 %v1447
    %1894 = vmatpush2.bf16.msra.mxu0 %v1446
    %1895 = vmatprep.subr.bf16.mxu0 %v1441
    %1896 = vmatpush2.bf16.msra.mxu0 %v1440
    %1897 = vmatprep.subr.bf16.mxu0 %v1435
    %1898 = vmatpush2.bf16.msra.mxu0 %v1434
    %1899 = vmatprep.subr.bf16.mxu0 %v1429
    %1900 = vmatpush2.bf16.msra.mxu0 %v1428
    %1901 = vmatprep.subr.bf16.mxu0 %v1423
    %1902 = vmatpush2.bf16.msra.mxu0 %v1422
    %1903 = vmatprep.subr.bf16.mxu0 %v1417
    %1904 = vmatpush2.bf16.msra.mxu0 %v1416
    %1905 = vmatprep.subr.bf16.mxu0 %v1411
    %1906 = vmatpush2.bf16.msra.mxu0 %v1410
    %1907 = vmatprep.subr.bf16.mxu0 %v1405
    %1908 = vmatpush2.bf16.msra.mxu0 %v1404
    %1909 = vmatprep.mubr.bf16.mxu0 %v387
    %1910 = vmatmul.mubr.bf16.gmra.mxu0 %v386
    %v1911 = vpop.f32.mrf.mxu0
    %v1912 = vadd.f32 %v1871, %v1911
    %v1913 = vpop.f32.mrf.mxu0
    %v1914 = vadd.f32 %v1873, %v1913
    %v1915 = vpop.f32.mrf.mxu0
    %v1916 = vpop.f32.mrf.mxu0
    %1917 = vdwg.mxu0
    %1918 = vmatprep.subr.bf16.mxu0 %v1495
    %1919 = vmatpush1.bf16.msra.mxu0 %v1494
    %1920 = vmatprep.subr.bf16.mxu0 %v1489
    %1921 = vmatpush1.bf16.msra.mxu0 %v1488
    %1922 = vmatprep.subr.bf16.mxu0 %v1483
    %1923 = vmatpush1.bf16.msra.mxu0 %v1482
    %1924 = vmatprep.subr.bf16.mxu0 %v1477
    %1925 = vmatpush1.bf16.msra.mxu0 %v1476
    %1926 = vmatprep.subr.bf16.mxu0 %v1471
    %1927 = vmatpush1.bf16.msra.mxu0 %v1470
    %1928 = vmatprep.subr.bf16.mxu0 %v1465
    %1929 = vmatpush1.bf16.msra.mxu0 %v1464
    %1930 = vmatprep.subr.bf16.mxu0 %v1459
    %1931 = vmatpush1.bf16.msra.mxu0 %v1458
    %1932 = vmatprep.subr.bf16.mxu0 %v1453
    %1933 = vmatpush1.bf16.msra.mxu0 %v1452
    %1934 = vmatprep.subr.bf16.mxu0 %v1543
    %1935 = vmatpush2.bf16.msra.mxu0 %v1542
    %1936 = vmatprep.subr.bf16.mxu0 %v1537
    %1937 = vmatpush2.bf16.msra.mxu0 %v1536
    %1938 = vmatprep.subr.bf16.mxu0 %v1531
    %1939 = vmatpush2.bf16.msra.mxu0 %v1530
    %1940 = vmatprep.subr.bf16.mxu0 %v1525
    %1941 = vmatpush2.bf16.msra.mxu0 %v1524
    %1942 = vmatprep.subr.bf16.mxu0 %v1519
    %1943 = vmatpush2.bf16.msra.mxu0 %v1518
    %1944 = vmatprep.subr.bf16.mxu0 %v1513
    %1945 = vmatpush2.bf16.msra.mxu0 %v1512
    %1946 = vmatprep.subr.bf16.mxu0 %v1507
    %1947 = vmatpush2.bf16.msra.mxu0 %v1506
    %1948 = vmatprep.subr.bf16.mxu0 %v1501
    %1949 = vmatpush2.bf16.msra.mxu0 %v1500
    %1950 = vmatprep.mubr.bf16.mxu0 %v389
    %1951 = vmatmul.mubr.bf16.gmra.mxu0 %v388
    %v1952 = vpop.f32.mrf.mxu0
    %v1953 = vadd.f32 %v1912, %v1952
    %v1954 = vpop.f32.mrf.mxu0
    %v1955 = vadd.f32 %v1914, %v1954
    %v1956 = vpop.f32.mrf.mxu0
    %v1957 = vpop.f32.mrf.mxu0
    %1958 = vdwg.mxu0
    %1959 = vmatprep.subr.bf16.mxu0 %v1305
    %1960 = vmatpush1.bf16.msra.mxu0 %v1304
    %1961 = vmatprep.subr.bf16.mxu0 %v1299
    %1962 = vmatpush1.bf16.msra.mxu0 %v1298
    %1963 = vmatprep.subr.bf16.mxu0 %v1293
    %1964 = vmatpush1.bf16.msra.mxu0 %v1292
    %1965 = vmatprep.subr.bf16.mxu0 %v1287
    %1966 = vmatpush1.bf16.msra.mxu0 %v1286
    %1967 = vmatprep.subr.bf16.mxu0 %v1281
    %1968 = vmatpush1.bf16.msra.mxu0 %v1280
    %1969 = vmatprep.subr.bf16.mxu0 %v1275
    %1970 = vmatpush1.bf16.msra.mxu0 %v1274
    %1971 = vmatprep.subr.bf16.mxu0 %v1269
    %1972 = vmatpush1.bf16.msra.mxu0 %v1268
    %1973 = vmatprep.subr.bf16.mxu0 %v1263
    %1974 = vmatpush1.bf16.msra.mxu0 %v1262
    %1975 = vmatprep.subr.bf16.mxu0 %v1353
    %1976 = vmatpush2.bf16.msra.mxu0 %v1352
    %1977 = vmatprep.subr.bf16.mxu0 %v1347
    %1978 = vmatpush2.bf16.msra.mxu0 %v1346
    %1979 = vmatprep.subr.bf16.mxu0 %v1341
    %1980 = vmatpush2.bf16.msra.mxu0 %v1340
    %1981 = vmatprep.subr.bf16.mxu0 %v1335
    %1982 = vmatpush2.bf16.msra.mxu0 %v1334
    %1983 = vmatprep.subr.bf16.mxu0 %v1329
    %1984 = vmatpush2.bf16.msra.mxu0 %v1328
    %1985 = vmatprep.subr.bf16.mxu0 %v1323
    %1986 = vmatpush2.bf16.msra.mxu0 %v1322
    %1987 = vmatprep.subr.bf16.mxu0 %v1317
    %1988 = vmatpush2.bf16.msra.mxu0 %v1316
    %1989 = vmatprep.subr.bf16.mxu0 %v1311
    %1990 = vmatpush2.bf16.msra.mxu0 %v1310
    %1991 = vmatprep.mubr.bf16.mxu0 %v385
    %1992 = vmatmul.mubr.bf16.gmra.mxu0 %v384
    %v1993 = vpop.f32.mrf.mxu0
    %v1994 = vadd.f32 %v356, %v1993
    %v1995 = vpop.f32.mrf.mxu0
    %v1996 = vadd.f32 %v360, %v1995
    %v1997 = vpop.f32.mrf.mxu0
    %v1998 = vpop.f32.mrf.mxu0
    %1999 = vdwg.mxu0
    %2000 = vmatprep.subr.bf16.mxu0 %v1401
    %2001 = vmatpush1.bf16.msra.mxu0 %v1400
    %2002 = vmatprep.subr.bf16.mxu0 %v1395
    %2003 = vmatpush1.bf16.msra.mxu0 %v1394
    %2004 = vmatprep.subr.bf16.mxu0 %v1389
    %2005 = vmatpush1.bf16.msra.mxu0 %v1388
    %2006 = vmatprep.subr.bf16.mxu0 %v1383
    %2007 = vmatpush1.bf16.msra.mxu0 %v1382
    %2008 = vmatprep.subr.bf16.mxu0 %v1377
    %2009 = vmatpush1.bf16.msra.mxu0 %v1376
    %2010 = vmatprep.subr.bf16.mxu0 %v1371
    %2011 = vmatpush1.bf16.msra.mxu0 %v1370
    %2012 = vmatprep.subr.bf16.mxu0 %v1365
    %2013 = vmatpush1.bf16.msra.mxu0 %v1364
    %2014 = vmatprep.subr.bf16.mxu0 %v1359
    %2015 = vmatpush1.bf16.msra.mxu0 %v1358
    %2016 = vmatprep.subr.bf16.mxu0 %v1449
    %2017 = vmatpush2.bf16.msra.mxu0 %v1448
    %2018 = vmatprep.subr.bf16.mxu0 %v1443
    %2019 = vmatpush2.bf16.msra.mxu0 %v1442
    %2020 = vmatprep.subr.bf16.mxu0 %v1437
    %2021 = vmatpush2.bf16.msra.mxu0 %v1436
    %2022 = vmatprep.subr.bf16.mxu0 %v1431
    %2023 = vmatpush2.bf16.msra.mxu0 %v1430
    %2024 = vmatprep.subr.bf16.mxu0 %v1425
    %2025 = vmatpush2.bf16.msra.mxu0 %v1424
    %2026 = vmatprep.subr.bf16.mxu0 %v1419
    %2027 = vmatpush2.bf16.msra.mxu0 %v1418
    %2028 = vmatprep.subr.bf16.mxu0 %v1413
    %2029 = vmatpush2.bf16.msra.mxu0 %v1412
    %2030 = vmatprep.subr.bf16.mxu0 %v1407
    %2031 = vmatpush2.bf16.msra.mxu0 %v1406
    %2032 = vmatprep.mubr.bf16.mxu0 %v387
    %2033 = vmatmul.mubr.bf16.gmra.mxu0 %v386
    %v2034 = vpop.f32.mrf.mxu0
    %v2035 = vadd.f32 %v1994, %v2034
    %v2036 = vpop.f32.mrf.mxu0
    %v2037 = vadd.f32 %v1996, %v2036
    %v2038 = vpop.f32.mrf.mxu0
    %v2039 = vpop.f32.mrf.mxu0
    %2040 = vdwg.mxu0
    %2041 = vmatprep.subr.bf16.mxu0 %v1497
    %2042 = vmatpush1.bf16.msra.mxu0 %v1496
    %2043 = vmatprep.subr.bf16.mxu0 %v1491
    %2044 = vmatpush1.bf16.msra.mxu0 %v1490
    %2045 = vmatprep.subr.bf16.mxu0 %v1485
    %2046 = vmatpush1.bf16.msra.mxu0 %v1484
    %2047 = vmatprep.subr.bf16.mxu0 %v1479
    %2048 = vmatpush1.bf16.msra.mxu0 %v1478
    %2049 = vmatprep.subr.bf16.mxu0 %v1473
    %2050 = vmatpush1.bf16.msra.mxu0 %v1472
    %2051 = vmatprep.subr.bf16.mxu0 %v1467
    %2052 = vmatpush1.bf16.msra.mxu0 %v1466
    %2053 = vmatprep.subr.bf16.mxu0 %v1461
    %2054 = vmatpush1.bf16.msra.mxu0 %v1460
    %2055 = vmatprep.subr.bf16.mxu0 %v1455
    %2056 = vmatpush1.bf16.msra.mxu0 %v1454
    %2057 = vmatprep.subr.bf16.mxu0 %v1545
    %2058 = vmatpush2.bf16.msra.mxu0 %v1544
    %2059 = vmatprep.subr.bf16.mxu0 %v1539
    %2060 = vmatpush2.bf16.msra.mxu0 %v1538
    %2061 = vmatprep.subr.bf16.mxu0 %v1533
    %2062 = vmatpush2.bf16.msra.mxu0 %v1532
    %2063 = vmatprep.subr.bf16.mxu0 %v1527
    %2064 = vmatpush2.bf16.msra.mxu0 %v1526
    %2065 = vmatprep.subr.bf16.mxu0 %v1521
    %2066 = vmatpush2.bf16.msra.mxu0 %v1520
    %2067 = vmatprep.subr.bf16.mxu0 %v1515
    %2068 = vmatpush2.bf16.msra.mxu0 %v1514
    %2069 = vmatprep.subr.bf16.mxu0 %v1509
    %2070 = vmatpush2.bf16.msra.mxu0 %v1508
    %2071 = vmatprep.subr.bf16.mxu0 %v1503
    %2072 = vmatpush2.bf16.msra.mxu0 %v1502
    %2073 = vmatprep.mubr.bf16.mxu0 %v389
    %2074 = vmatmul.mubr.bf16.gmra.mxu0 %v388
    %v2075 = vpop.f32.mrf.mxu0
    %v2076 = vadd.f32 %v2035, %v2075
    %v2077 = vpop.f32.mrf.mxu0
    %v2078 = vadd.f32 %v2037, %v2077
    %v2079 = vpop.f32.mrf.mxu0
    %v2080 = vpop.f32.mrf.mxu0
    %2081 = vdwg.mxu0
    %2082 = vmatprep.subr.bf16.mxu0 %v1307
    %2083 = vmatpush1.bf16.msra.mxu0 %v1306
    %2084 = vmatprep.subr.bf16.mxu0 %v1301
    %2085 = vmatpush1.bf16.msra.mxu0 %v1300
    %2086 = vmatprep.subr.bf16.mxu0 %v1295
    %2087 = vmatpush1.bf16.msra.mxu0 %v1294
    %2088 = vmatprep.subr.bf16.mxu0 %v1289
    %2089 = vmatpush1.bf16.msra.mxu0 %v1288
    %2090 = vmatprep.subr.bf16.mxu0 %v1283
    %2091 = vmatpush1.bf16.msra.mxu0 %v1282
    %2092 = vmatprep.subr.bf16.mxu0 %v1277
    %2093 = vmatpush1.bf16.msra.mxu0 %v1276
    %2094 = vmatprep.subr.bf16.mxu0 %v1271
    %2095 = vmatpush1.bf16.msra.mxu0 %v1270
    %2096 = vmatprep.subr.bf16.mxu0 %v1265
    %2097 = vmatpush1.bf16.msra.mxu0 %v1264
    %2098 = vmatprep.subr.bf16.mxu0 %v1355
    %2099 = vmatpush2.bf16.msra.mxu0 %v1354
    %2100 = vmatprep.subr.bf16.mxu0 %v1349
    %2101 = vmatpush2.bf16.msra.mxu0 %v1348
    %2102 = vmatprep.subr.bf16.mxu0 %v1343
    %2103 = vmatpush2.bf16.msra.mxu0 %v1342
    %2104 = vmatprep.subr.bf16.mxu0 %v1337
    %2105 = vmatpush2.bf16.msra.mxu0 %v1336
    %2106 = vmatprep.subr.bf16.mxu0 %v1331
    %2107 = vmatpush2.bf16.msra.mxu0 %v1330
    %2108 = vmatprep.subr.bf16.mxu0 %v1325
    %2109 = vmatpush2.bf16.msra.mxu0 %v1324
    %2110 = vmatprep.subr.bf16.mxu0 %v1319
    %2111 = vmatpush2.bf16.msra.mxu0 %v1318
    %2112 = vmatprep.subr.bf16.mxu0 %v1313
    %2113 = vmatpush2.bf16.msra.mxu0 %v1312
    %2114 = vmatprep.mubr.bf16.mxu0 %v385
    %2115 = vmatmul.mubr.bf16.gmra.mxu0 %v384
    %v2116 = vpop.f32.mrf.mxu0
    %v2117 = vadd.f32 %v364, %v2116
    %v2118 = vpop.f32.mrf.mxu0
    %v2119 = vadd.f32 %v368, %v2118
    %v2120 = vpop.f32.mrf.mxu0
    %v2121 = vpop.f32.mrf.mxu0
    %2122 = vdwg.mxu0
    %2123 = vmatprep.subr.bf16.mxu0 %v1403
    %2124 = vmatpush1.bf16.msra.mxu0 %v1402
    %2125 = vmatprep.subr.bf16.mxu0 %v1397
    %2126 = vmatpush1.bf16.msra.mxu0 %v1396
    %2127 = vmatprep.subr.bf16.mxu0 %v1391
    %2128 = vmatpush1.bf16.msra.mxu0 %v1390
    %2129 = vmatprep.subr.bf16.mxu0 %v1385
    %2130 = vmatpush1.bf16.msra.mxu0 %v1384
    %2131 = vmatprep.subr.bf16.mxu0 %v1379
    %2132 = vmatpush1.bf16.msra.mxu0 %v1378
    %2133 = vmatprep.subr.bf16.mxu0 %v1373
    %2134 = vmatpush1.bf16.msra.mxu0 %v1372
    %2135 = vmatprep.subr.bf16.mxu0 %v1367
    %2136 = vmatpush1.bf16.msra.mxu0 %v1366
    %2137 = vmatprep.subr.bf16.mxu0 %v1361
    %2138 = vmatpush1.bf16.msra.mxu0 %v1360
    %2139 = vmatprep.subr.bf16.mxu0 %v1451
    %2140 = vmatpush2.bf16.msra.mxu0 %v1450
    %2141 = vmatprep.subr.bf16.mxu0 %v1445
    %2142 = vmatpush2.bf16.msra.mxu0 %v1444
    %2143 = vmatprep.subr.bf16.mxu0 %v1439
    %2144 = vmatpush2.bf16.msra.mxu0 %v1438
    %2145 = vmatprep.subr.bf16.mxu0 %v1433
    %2146 = vmatpush2.bf16.msra.mxu0 %v1432
    %2147 = vmatprep.subr.bf16.mxu0 %v1427
    %2148 = vmatpush2.bf16.msra.mxu0 %v1426
    %2149 = vmatprep.subr.bf16.mxu0 %v1421
    %2150 = vmatpush2.bf16.msra.mxu0 %v1420
    %2151 = vmatprep.subr.bf16.mxu0 %v1415
    %2152 = vmatpush2.bf16.msra.mxu0 %v1414
    %2153 = vmatprep.subr.bf16.mxu0 %v1409
    %2154 = vmatpush2.bf16.msra.mxu0 %v1408
    %2155 = vmatprep.mubr.bf16.mxu0 %v387
    %2156 = vmatmul.mubr.bf16.gmra.mxu0 %v386
    %v2157 = vpop.f32.mrf.mxu0
    %v2158 = vadd.f32 %v2117, %v2157
    %v2159 = vpop.f32.mrf.mxu0
    %v2160 = vadd.f32 %v2119, %v2159
    %v2161 = vpop.f32.mrf.mxu0
    %v2162 = vpop.f32.mrf.mxu0
    %2163 = vdwg.mxu0
    %2164 = vmatprep.subr.bf16.mxu0 %v1499
    %2165 = vmatpush1.bf16.msra.mxu0 %v1498
    %2166 = vmatprep.subr.bf16.mxu0 %v1493
    %2167 = vmatpush1.bf16.msra.mxu0 %v1492
    %2168 = vmatprep.subr.bf16.mxu0 %v1487
    %2169 = vmatpush1.bf16.msra.mxu0 %v1486
    %2170 = vmatprep.subr.bf16.mxu0 %v1481
    %2171 = vmatpush1.bf16.msra.mxu0 %v1480
    %2172 = vmatprep.subr.bf16.mxu0 %v1475
    %2173 = vmatpush1.bf16.msra.mxu0 %v1474
    %2174 = vmatprep.subr.bf16.mxu0 %v1469
    %2175 = vmatpush1.bf16.msra.mxu0 %v1468
    %2176 = vmatprep.subr.bf16.mxu0 %v1463
    %2177 = vmatpush1.bf16.msra.mxu0 %v1462
    %2178 = vmatprep.subr.bf16.mxu0 %v1457
    %2179 = vmatpush1.bf16.msra.mxu0 %v1456
    %2180 = vmatprep.subr.bf16.mxu0 %v1547
    %2181 = vmatpush2.bf16.msra.mxu0 %v1546
    %2182 = vmatprep.subr.bf16.mxu0 %v1541
    %2183 = vmatpush2.bf16.msra.mxu0 %v1540
    %2184 = vmatprep.subr.bf16.mxu0 %v1535
    %2185 = vmatpush2.bf16.msra.mxu0 %v1534
    %2186 = vmatprep.subr.bf16.mxu0 %v1529
    %2187 = vmatpush2.bf16.msra.mxu0 %v1528
    %2188 = vmatprep.subr.bf16.mxu0 %v1523
    %2189 = vmatpush2.bf16.msra.mxu0 %v1522
    %2190 = vmatprep.subr.bf16.mxu0 %v1517
    %2191 = vmatpush2.bf16.msra.mxu0 %v1516
    %2192 = vmatprep.subr.bf16.mxu0 %v1511
    %2193 = vmatpush2.bf16.msra.mxu0 %v1510
    %2194 = vmatprep.subr.bf16.mxu0 %v1505
    %2195 = vmatpush2.bf16.msra.mxu0 %v1504
    %2196 = vmatprep.mubr.bf16.mxu0 %v389
    %2197 = vmatmul.mubr.bf16.gmra.mxu0 %v388
    %v2198 = vpop.f32.mrf.mxu0
    %v2199 = vadd.f32 %v2158, %v2198
    %v2200 = vpop.f32.mrf.mxu0
    %v2201 = vadd.f32 %v2160, %v2200
    %v2202 = vpop.f32.mrf.mxu0
    %v2203 = vpop.f32.mrf.mxu0
    %2204 = vdwg.mxu0
    %v2205 = vtanh.pop %v1953
    %v2206 = vtanh.pop %v1955
    %v2207 = vtanh.pop %v2076
    %v2208 = vtanh.pop %v2078
    %v2209 = vtanh.pop %v2199
    %v2210 = vtanh.pop %v2201
    %2211 = vst [vmem:[#allocation8] sm:$0xff] %v2205
    %2212 = vst [vmem:[#allocation8 + $0x8] sm:$0xff] %v2206
    %2213 = vst [vmem:[#allocation8 + $0x10] sm:$0xff] %v2207
    %2214 = vst [vmem:[#allocation8 + $0x18] sm:$0xff] %v2208
    %2215 = vst [vmem:[#allocation8 + $0x20] sm:$0xff] %v2209
    %2216 = vst [vmem:[#allocation8 + $0x28] sm:$0xff] %v2210
    // Predicated region
    $region26: #{tpu_custom_call.1} parent=1 // pred_check
      _
    $region27: #{tpu_custom_call.1} parent=1 // pred_check_branch
      %2218 = sbr.rel (0) target = $region29
    $region28: #{tpu_custom_call.1} parent=1 // pred_region
      %s2220 = ssub.s32 768, 768
      %2221 = vsyncadd [#allocation4], %s2220
      %s2223 = sshll.u32 [#allocation8], 4
      %s2224 = int_to_ptr.vmem [resolvable:$true] %s2223
      %2226 = dma.vmem_to_hbm [thread:$0]  %s2224, 768, %s3, [#allocation4]
    $region29: #{tpu_custom_call.1} parent=1 // pred_fallthru
      _
    // Predicated region
    $region30: #{tpu_custom_call.1} parent=1 // pred_check
      _
    $region31: #{tpu_custom_call.1} parent=1 // pred_check_branch
      %2228 = sbr.rel (0) target = $region33
    $region32: #{tpu_custom_call.1} parent=1 // pred_region
      %2229 = dma.done [#allocation4], 768
    $region33: #{tpu_custom_call.1} parent=1 // pred_fallthru
      _
    %2230 = vsyncpa [#allocation3], 1
    %2231 = vsyncpa [#allocation6], 1
    %2232 = vsyncpa [#allocation4], 1

</llo_original>
